<compile_context>
chip_gen: v6e
topology: v6e:2x2x1
jax: 0.10.0
libtpu: 0.0.40
codegen_flags: <defaults>
</compile_context>

<pallas_src>
import jax
import jax.numpy as jnp
import numpy as np
from jax.experimental import pallas as pl
from jax.experimental.pallas import tpu as pltpu

# ----------------------------- small config ---------------------------------
NUM_CLASS = 4
NUM_HEADING_BIN = 4
NUM_SIZE_CLUSTER = 4
NUM_PROPOSAL = 16          # npoint of the SA module
SEED_FEAT_DIM = 32         # C of input seed features
PROPOSAL_SIZE = 32         # hidden size of SA mlp and proposal head
RADIUS = 0.3
NSAMPLE = 8
BN_EPS = 1e-5
OUT_CH = 2 + 3 + NUM_HEADING_BIN * 2 + NUM_SIZE_CLUSTER * 4 + NUM_CLASS  # = 33
OUT_PAD = 128              # lane-dense padding of the fused output tile
AGG_OFF = 64               # lane offset where pooled agg features are stored

B = 2                      # batch
K = 64                     # number of seed points
CIN = SEED_FEAT_DIM + 3    # use_xyz=True -> xyz concatenated in front of features
ROWS = B * NUM_PROPOSAL    # batch folded into the M dimension (= 32)
GROWS = NSAMPLE * ROWS     # grouped rows, sample-major (= 256)
TROWS = B * K + ROWS       # rows of the [point-table ; proposal-offsets] operand

assert OUT_CH <= AGG_OFF and AGG_OFF + PROPOSAL_SIZE <= OUT_PAD


# ========================= fused Pallas kernel ===============================
# grouping gather + xyz-centering (one-hot MXU matmul), SA shared MLP
# (3x conv, BN folded, + bias + ReLU), sample-major max-pool over nsample,
# proposal head (2x conv+bias+ReLU, final conv+bias), single lane-dense store.
def _fused_kernel(gidx_ref, oidx_ref, taboff_ref, w1_ref, wh_ref, w6a_ref,
                  b_ref, out_ref):
    f32 = jnp.float32
    P = PROPOSAL_SIZE

    bias = b_ref[...]                                      # (8, OUT_PAD)

    # ---- grouping gather + per-proposal xyz centering as ONE MXU pass ------
    # sel[p, j] = +1 at j == gidx[p] (row of the point table) and -1 at
    # j == oidx[p] (row of the proposal-offset table), so
    #   x = sel @ [xyz/R | feats ; new_xyz/R | 0]
    #     = [ (xyz_pt - new_xyz)/R | feats ]         (exact: one +/- per row)
    lane = jax.lax.broadcasted_iota(jnp.int32, (GROWS, TROWS), 1)
    sel = ((lane == gidx_ref[...]).astype(f32)
           - (lane == oidx_ref[...]).astype(f32))          # (256, 160)
    x = jnp.dot(sel, taboff_ref[...], preferred_element_type=f32)   # (256, CIN)

    # ---- SA shared MLP (BN scales already folded into the weights) ---------
    h = jnp.maximum(jnp.dot(x, w1_ref[...], preferred_element_type=f32)
                    + bias[0:1, 0:P], 0.0)
    h = jnp.maximum(jnp.dot(h, wh_ref[0:P, :], preferred_element_type=f32)
                    + bias[1:2, 0:P], 0.0)
    h = jnp.maximum(jnp.dot(h, wh_ref[P:2 * P, :], preferred_element_type=f32)
                    + bias[2:3, 0:P], 0.0)

    # ---- max-pool over nsample: leading-axis (sample-major) VPU max tree ---
    pooled = h[0:ROWS]
    for s in range(1, NSAMPLE):
        pooled = jnp.maximum(pooled, h[s * ROWS:(s + 1) * ROWS])

    # ---- proposal head (BN scales folded into w4/w5) ------------------------
    g = jnp.maximum(jnp.dot(pooled, wh_ref[2 * P:3 * P, :],
                            preferred_element_type=f32) + bias[3:4, 0:P], 0.0)
    g = jnp.maximum(jnp.dot(g, wh_ref[3 * P:4 * P, :],
                            preferred_element_type=f32) + bias[4:5, 0:P], 0.0)

    net = jnp.dot(g, w6a_ref[0:P, :], preferred_element_type=f32) + bias[5:6, :]
    # pooled agg features shifted into lanes [AGG_OFF, AGG_OFF+P) of the same
    # tile via the shift matrix packed into w6a rows P:2P -> one full-width
    # lane-dense store, no second output buffer.
    agg = jnp.dot(pooled, w6a_ref[P:2 * P, :], preferred_element_type=f32)
    out_ref[...] = net + agg


def fused_sa_and_head(gidx, tab_off, params):
    """gidx: (GROWS,1) int32, tab_off: (TROWS, CIN) f32
       -> (ROWS, OUT_PAD) f32: lanes [0:OUT_CH] = head scores,
          lanes [AGG_OFF:AGG_OFF+P] = pooled aggregated vote features."""
    args = (gidx, params["oidx"], tab_off, params["w1"], params["w_hid"],
            params["w6aug"], params["biases"])
    # no grid: single invocation, whole arrays resident in VMEM, no pipelining
    # and no double buffering of the many tiny operands.
    in_specs = [pl.BlockSpec(memory_space=pltpu.MemorySpace.VMEM)
                for _ in range(len(args))]
    out_specs = pl.BlockSpec(memory_space=pltpu.MemorySpace.VMEM)
    return pl.pallas_call(
        _fused_kernel,
        out_shape=jax.ShapeDtypeStruct((ROWS, OUT_PAD), jnp.float32),
        in_specs=in_specs,
        out_specs=out_specs,
    )(*args)


# ============================ JAX glue ======================================
def farthest_point_sample(xyz, npoint):
    """xyz: (B, N, 3) -> (B, npoint) int32, deterministic FPS starting at 0."""
    # TODO(synk): inherently sequential scalar loop; kept in JAX glue.
    def one(x):
        n = x.shape[0]

        def body(i, state):
            inds, dists, last = state
            d = jnp.sum((x - x[last]) ** 2, axis=-1)
            dists = jnp.minimum(dists, d)
            nxt = jnp.argmax(dists).astype(jnp.int32)
            inds = inds.at[i].set(nxt)
            return inds, dists, nxt

        inds0 = jnp.zeros((npoint,), jnp.int32)
        dists0 = jnp.full((n,), 1e10, jnp.float32)
        inds, _, _ = jax.lax.fori_loop(1, npoint, body,
                                       (inds0, dists0, jnp.int32(0)))
        return inds

    return jax.vmap(one)(xyz)


def ball_query(new_xyz, xyz, radius, nsample):
    """new_xyz: (B,S,3), xyz: (B,N,3) -> (B,S,nsample) int32 neighbour indices."""
    n = xyz.shape[1]
    d2 = jnp.sum((new_xyz[:, :, None, :] - xyz[:, None, :, :]) ** 2, axis=-1)
    mask = d2 < radius * radius
    order = jnp.arange(n, dtype=jnp.int32)
    key = jnp.where(mask, order, n).astype(jnp.float32)
    # nsample smallest keys (ascending) via top_k on the negated key (no full sort)
    neg_vals, _ = jax.lax.top_k(-key, nsample)
    sorted_idx = (-neg_vals).astype(jnp.int32)                       # (B,S,ns)
    any_valid = mask.any(axis=-1)
    first = jnp.where(any_valid, sorted_idx[..., 0], 0)
    idx = jnp.where(sorted_idx == n, first[..., None], sorted_idx)
    idx = jnp.where(any_valid[..., None], idx, 0)
    return idx.astype(jnp.int32)


def proposal_module_forward(xyz, features, params):
    """
    xyz:      (B, K, 3)  float32
    features: (B, C, K)  float32   (PyTorch channel-first layout)
    returns data_dict (python dict of jnp arrays)
    """
    data_dict = {}

    # --- PointnetSAModuleVotes: sampling (glue) ------------------------------
    fps_inds = farthest_point_sample(xyz, NUM_PROPOSAL)                   # (B,S)
    new_xyz = jnp.take_along_axis(xyz, fps_inds[..., None], axis=1)       # (B,S,3)
    idx = ball_query(new_xyz, xyz, RADIUS, NSAMPLE)                       # (B,S,ns)

    # --- build the tiny kernel operands (gather itself happens in-kernel) ----
    inv_r = 1.0 / RADIUS
    feats_t = jnp.transpose(features, (0, 2, 1))                          # (B,K,C)
    table = jnp.concatenate([xyz * inv_r, feats_t],
                            axis=-1).reshape(B * K, CIN)                  # (128,CIN)
    off = jnp.concatenate(
        [new_xyz.reshape(ROWS, 3) * inv_r,
         jnp.zeros((ROWS, SEED_FEAT_DIM), jnp.float32)], axis=-1)         # (32,CIN)
    tab_off = jnp.concatenate([table, off], axis=0)                       # (160,CIN)

    # sample-major global point row index: p = s*ROWS + (b*S + j)
    gidx = idx + (jnp.arange(B, dtype=jnp.int32) * K)[:, None, None]      # (B,S,ns)
    gidx = jnp.transpose(gidx, (2, 0, 1)).reshape(GROWS, 1)               # (256,1)

    # --- fused gather + SA shared-MLP + max-pool + head (one Pallas call) ----
    out = fused_sa_and_head(gidx, tab_off, params)                        # (32,128)
    agg_features = out[:, AGG_OFF:AGG_OFF + PROPOSAL_SIZE].reshape(
        B, NUM_PROPOSAL, PROPOSAL_SIZE)                                   # (B,S,P)
    net_t = out[:, :OUT_CH].reshape(B, NUM_PROPOSAL, OUT_CH)              # (B,S,33)

    data_dict["aggregated_vote_xyz"] = new_xyz
    data_dict["aggregated_vote_features"] = agg_features                  # (B,S,P)
    data_dict["aggregated_vote_inds"] = fps_inds

    # --- decode_scores (glue) -------------------------------------------------
    nh, ns = NUM_HEADING_BIN, NUM_SIZE_CLUSTER
    bsz, nprop = net_t.shape[0], net_t.shape[1]
    objectness_scores = net_t[:, :, 0:2]
    center = new_xyz + net_t[:, :, 2:5]
    heading_scores = net_t[:, :, 5:5 + nh]
    heading_residuals_normalized = net_t[:, :, 5 + nh:5 + nh * 2]
    size_scores = net_t[:, :, 5 + nh * 2:5 + nh * 2 + ns]
    size_residuals_normalized = net_t[:, :, 5 + nh * 2 + ns:5 + nh * 2 + ns * 4]
    size_residuals_normalized = size_residuals_normalized.reshape(
        bsz, nprop, ns, 3)
    sem_cls_scores = net_t[:, :, 5 + nh * 2 + ns * 4:]

    data_dict["objectness_scores"] = objectness_scores
    data_dict["center"] = center
    data_dict["heading_scores"] = heading_scores
    data_dict["heading_residuals_normalized"] = heading_residuals_normalized
    data_dict["heading_residuals"] = heading_residuals_normalized * (np.pi / nh)
    data_dict["size_scores"] = size_scores
    data_dict["size_residuals_normalized"] = size_residuals_normalized
    data_dict["size_residuals"] = (size_residuals_normalized
                                   * params["mean_size_arr"][None, None, :, :])
    data_dict["sem_cls_scores"] = sem_cls_scores
    # TODO(synk): bbox_corner (decode_pred_box) needs ScannetDatasetConfig.param2obb_batch
    # and get_3d_box_batch (host-side numpy dataset utilities) -- not reproduced here.
    data_dict["bbox_feature"] = data_dict["aggregated_vote_features"]
    data_dict["bbox_mask"] = jnp.argmax(objectness_scores, axis=-1)
    data_dict["bbox_sems"] = jnp.argmax(sem_cls_scores, axis=-1)
    return data_dict


# ============================ parameter init =================================
def fold_bn(gamma, beta, running_mean, running_var, eps=BN_EPS):
    scale = gamma / jnp.sqrt(running_var + eps)
    bias = beta - running_mean * scale
    return scale, bias


def init_params(key):
    ks = jax.random.split(key, 12)
    p = PROPOSAL_SIZE

    def w(k, cin, cout):
        return (jax.random.normal(k, (cin, cout), jnp.float32)
                / jnp.sqrt(jnp.float32(cin)))

    def bn(k, c):
        k1, k2 = jax.random.split(k)
        gamma = 1.0 + 0.05 * jax.random.normal(k1, (c,), jnp.float32)
        beta = 0.05 * jax.random.normal(k2, (c,), jnp.float32)
        return fold_bn(gamma, beta, jnp.zeros((c,)), jnp.ones((c,)))

    # SA shared-MLP weights (BN scale folded into the conv weights)
    s1, b1 = bn(ks[1], p); w1 = w(ks[0], CIN, p) * s1[None, :]
    s2, b2 = bn(ks[3], p); w2 = w(ks[2], p, p) * s2[None, :]
    s3, b3 = bn(ks[5], p); w3 = w(ks[4], p, p) * s3[None, :]
    # proposal head
    s4, b4 = bn(ks[7], p); w4 = w(ks[6], p, p) * s4[None, :]
    s5, b5 = bn(ks[9], p); w5 = w(ks[8], p, p) * s5[None, :]
    w6_raw = w(ks[10], p, OUT_CH)
    bias6_raw = 0.05 * jax.random.normal(ks[11], (OUT_CH,), jnp.float32)

    # pack the four hidden (p,p) weights along sublanes -> one (4p, p) operand
    w_hid = jnp.concatenate([w2, w3, w4, w5], axis=0)                  # (128, 32)

    # final-layer weight padded 33 -> OUT_PAD lanes + shift matrix that drops
    # the pooled features into lanes [AGG_OFF, AGG_OFF+p) of the same tile
    w6pad = jnp.zeros((p, OUT_PAD), jnp.float32).at[:, :OUT_CH].set(w6_raw)
    eshift = jnp.zeros((p, OUT_PAD), jnp.float32).at[
        jnp.arange(p), AGG_OFF + jnp.arange(p)].set(1.0)
    w6aug = jnp.concatenate([w6pad, eshift], axis=0)                   # (64, 128)

    # all biases packed into one (8, OUT_PAD) operand
    biases = jnp.zeros((8, OUT_PAD), jnp.float32)
    biases = (biases.at[0, :p].set(b1).at[1, :p].set(b2).at[2, :p].set(b3)
                    .at[3, :p].set(b4).at[4, :p].set(b5)
                    .at[5, :OUT_CH].set(bias6_raw))

    # constant proposal-offset index column (row q of the offset sub-table)
    oidx = jnp.asarray(
        (np.tile(np.arange(ROWS), NSAMPLE) + B * K).astype(np.int32)
    ).reshape(GROWS, 1)

    mean_size_arr = jnp.asarray(
        np.linspace(0.2, 2.0, NUM_SIZE_CLUSTER * 3, dtype=np.float32)
        .reshape(NUM_SIZE_CLUSTER, 3))

    return {"w1": w1, "w_hid": w_hid, "w6aug": w6aug, "biases": biases,
            "oidx": oidx, "mean_size_arr": mean_size_arr}


# ================================ main =======================================
if __name__ == "__main__":
    key = jax.random.PRNGKey(0)
    k_xyz, k_feat, k_par = jax.random.split(key, 3)

    xyz = jax.random.uniform(k_xyz, (B, K, 3), jnp.float32) * 0.8        # (B,K,3)
    features = jax.random.normal(k_feat, (B, SEED_FEAT_DIM, K), jnp.float32)  # (B,C,K)
    params = init_params(k_par)

    fwd = jax.jit(proposal_module_forward)
    data_dict = fwd(xyz, features, params)
    data_dict = jax.tree_util.tree_map(jax.block_until_ready, data_dict)

    # light sanity checks on shapes / finiteness
    assert data_dict["objectness_scores"].shape == (B, NUM_PROPOSAL, 2)
    assert data_dict["center"].shape == (B, NUM_PROPOSAL, 3)
    assert data_dict["heading_scores"].shape == (B, NUM_PROPOSAL, NUM_HEADING_BIN)
    assert data_dict["size_residuals"].shape == (B, NUM_PROPOSAL, NUM_SIZE_CLUSTER, 3)
    assert data_dict["sem_cls_scores"].shape == (B, NUM_PROPOSAL, NUM_CLASS)
    assert data_dict["aggregated_vote_features"].shape == (B, NUM_PROPOSAL, PROPOSAL_SIZE)
    for v in jax.tree_util.tree_leaves(data_dict):
        assert bool(jnp.all(jnp.isfinite(v.astype(jnp.float32))))

    print("KERNEL_OK")
</pallas_src>

<mosaic_0001>
module attributes {stable_mosaic.version = 11 : i64} {
  func.func @_fused_kernel(%arg0: memref<256x1xi32, #tpu.memory_space<vmem>>, %arg1: memref<256x1xi32, #tpu.memory_space<vmem>>, %arg2: memref<160x35xf32, #tpu.memory_space<vmem>>, %arg3: memref<35x32xf32, #tpu.memory_space<vmem>>, %arg4: memref<128x32xf32, #tpu.memory_space<vmem>>, %arg5: memref<64x128xf32, #tpu.memory_space<vmem>>, %arg6: memref<8x128xf32, #tpu.memory_space<vmem>>, %arg7: memref<32x128xf32, #tpu.memory_space<vmem>>) attributes {dimension_semantics = [], scalar_prefetch = 0 : i64, scratch_operands = 0 : i64, tpu.core_type = #tpu.core_type<tc>} {
    %c0 = arith.constant 0 : index
    %c0_0 = arith.constant 0 : index
    %0 = vector.load %arg6[%c0, %c0_0] : memref<8x128xf32, #tpu.memory_space<vmem>>, vector<8x128xf32>
    %1 = tpu.iota {dimensions = array<i32: 1>} : vector<256x160xi32>
    %c0_1 = arith.constant 0 : index
    %c0_2 = arith.constant 0 : index
    %2 = vector.load %arg0[%c0_1, %c0_2] : memref<256x1xi32, #tpu.memory_space<vmem>>, vector<256x1xi32>
    %3 = vector.broadcast %2 : vector<256x1xi32> to vector<256x160xi32>
    %4 = arith.cmpi eq, %1, %3 : vector<256x160xi32>
    %5 = arith.extui %4 : vector<256x160xi1> to vector<256x160xi32>
    %6 = arith.sitofp %5 : vector<256x160xi32> to vector<256x160xf32>
    %c0_3 = arith.constant 0 : index
    %c0_4 = arith.constant 0 : index
    %7 = vector.load %arg1[%c0_3, %c0_4] : memref<256x1xi32, #tpu.memory_space<vmem>>, vector<256x1xi32>
    %8 = vector.broadcast %7 : vector<256x1xi32> to vector<256x160xi32>
    %9 = arith.cmpi eq, %1, %8 : vector<256x160xi32>
    %10 = arith.extui %9 : vector<256x160xi1> to vector<256x160xi32>
    %11 = arith.sitofp %10 : vector<256x160xi32> to vector<256x160xf32>
    %12 = arith.subf %6, %11 : vector<256x160xf32>
    %c0_5 = arith.constant 0 : index
    %c0_6 = arith.constant 0 : index
    %13 = vector.load %arg2[%c0_5, %c0_6] : memref<160x35xf32, #tpu.memory_space<vmem>>, vector<160x35xf32>
    %cst = arith.constant dense<0.000000e+00> : vector<256x35xf32>
    %14 = tpu.matmul %12, %13, %cst {dimension_numbers = #tpu.dot_dimension_numbers<[1], [0], [0], [1], [0, 0, 1, 1], [], []>} : vector<256x160xf32>, vector<160x35xf32>, vector<256x35xf32> -> vector<256x35xf32>
    %c0_7 = arith.constant 0 : index
    %c0_8 = arith.constant 0 : index
    %15 = vector.load %arg3[%c0_7, %c0_8] : memref<35x32xf32, #tpu.memory_space<vmem>>, vector<35x32xf32>
    %cst_9 = arith.constant dense<0.000000e+00> : vector<256x32xf32>
    %16 = tpu.matmul %14, %15, %cst_9 {dimension_numbers = #tpu.dot_dimension_numbers<[1], [0], [0], [1], [0, 0, 1, 1], [], []>} : vector<256x35xf32>, vector<35x32xf32>, vector<256x32xf32> -> vector<256x32xf32>
    %17 = vector.extract_strided_slice %0 {offsets = [0, 0], sizes = [1, 32], strides = [1, 1]} : vector<8x128xf32> to vector<1x32xf32>
    %18 = vector.broadcast %17 : vector<1x32xf32> to vector<256x32xf32>
    %19 = arith.addf %16, %18 : vector<256x32xf32>
    %cst_10 = arith.constant 0.000000e+00 : f32
    %20 = vector.broadcast %cst_10 : f32 to vector<256x32xf32>
    %21 = arith.maximumf %19, %20 : vector<256x32xf32>
    %c0_11 = arith.constant 0 : index
    %c0_12 = arith.constant 0 : index
    %22 = vector.load %arg4[%c0_11, %c0_12] : memref<128x32xf32, #tpu.memory_space<vmem>>, vector<32x32xf32>
    %cst_13 = arith.constant dense<0.000000e+00> : vector<256x32xf32>
    %23 = tpu.matmul %21, %22, %cst_13 {dimension_numbers = #tpu.dot_dimension_numbers<[1], [0], [0], [1], [0, 0, 1, 1], [], []>} : vector<256x32xf32>, vector<32x32xf32>, vector<256x32xf32> -> vector<256x32xf32>
    %24 = vector.extract_strided_slice %0 {offsets = [1, 0], sizes = [1, 32], strides = [1, 1]} : vector<8x128xf32> to vector<1x32xf32>
    %25 = vector.broadcast %24 : vector<1x32xf32> to vector<256x32xf32>
    %26 = arith.addf %23, %25 : vector<256x32xf32>
    %cst_14 = arith.constant 0.000000e+00 : f32
    %27 = vector.broadcast %cst_14 : f32 to vector<256x32xf32>
    %28 = arith.maximumf %26, %27 : vector<256x32xf32>
    %c32 = arith.constant 32 : index
    %c0_15 = arith.constant 0 : index
    %29 = vector.load %arg4[%c32, %c0_15] : memref<128x32xf32, #tpu.memory_space<vmem>>, vector<32x32xf32>
    %cst_16 = arith.constant dense<0.000000e+00> : vector<256x32xf32>
    %30 = tpu.matmul %28, %29, %cst_16 {dimension_numbers = #tpu.dot_dimension_numbers<[1], [0], [0], [1], [0, 0, 1, 1], [], []>} : vector<256x32xf32>, vector<32x32xf32>, vector<256x32xf32> -> vector<256x32xf32>
    %31 = vector.extract_strided_slice %0 {offsets = [2, 0], sizes = [1, 32], strides = [1, 1]} : vector<8x128xf32> to vector<1x32xf32>
    %32 = vector.broadcast %31 : vector<1x32xf32> to vector<256x32xf32>
    %33 = arith.addf %30, %32 : vector<256x32xf32>
    %cst_17 = arith.constant 0.000000e+00 : f32
    %34 = vector.broadcast %cst_17 : f32 to vector<256x32xf32>
    %35 = arith.maximumf %33, %34 : vector<256x32xf32>
    %36 = vector.extract_strided_slice %35 {offsets = [0, 0], sizes = [32, 32], strides = [1, 1]} : vector<256x32xf32> to vector<32x32xf32>
    %37 = vector.extract_strided_slice %35 {offsets = [32, 0], sizes = [32, 32], strides = [1, 1]} : vector<256x32xf32> to vector<32x32xf32>
    %38 = arith.maximumf %36, %37 : vector<32x32xf32>
    %39 = vector.extract_strided_slice %35 {offsets = [64, 0], sizes = [32, 32], strides = [1, 1]} : vector<256x32xf32> to vector<32x32xf32>
    %40 = arith.maximumf %38, %39 : vector<32x32xf32>
    %41 = vector.extract_strided_slice %35 {offsets = [96, 0], sizes = [32, 32], strides = [1, 1]} : vector<256x32xf32> to vector<32x32xf32>
    %42 = arith.maximumf %40, %41 : vector<32x32xf32>
    %43 = vector.extract_strided_slice %35 {offsets = [128, 0], sizes = [32, 32], strides = [1, 1]} : vector<256x32xf32> to vector<32x32xf32>
    %44 = arith.maximumf %42, %43 : vector<32x32xf32>
    %45 = vector.extract_strided_slice %35 {offsets = [160, 0], sizes = [32, 32], strides = [1, 1]} : vector<256x32xf32> to vector<32x32xf32>
    %46 = arith.maximumf %44, %45 : vector<32x32xf32>
    %47 = vector.extract_strided_slice %35 {offsets = [192, 0], sizes = [32, 32], strides = [1, 1]} : vector<256x32xf32> to vector<32x32xf32>
    %48 = arith.maximumf %46, %47 : vector<32x32xf32>
    %49 = vector.extract_strided_slice %35 {offsets = [224, 0], sizes = [32, 32], strides = [1, 1]} : vector<256x32xf32> to vector<32x32xf32>
    %50 = arith.maximumf %48, %49 : vector<32x32xf32>
    %c64 = arith.constant 64 : index
    %c0_18 = arith.constant 0 : index
    %51 = vector.load %arg4[%c64, %c0_18] : memref<128x32xf32, #tpu.memory_space<vmem>>, vector<32x32xf32>
    %cst_19 = arith.constant dense<0.000000e+00> : vector<32x32xf32>
    %52 = tpu.matmul %50, %51, %cst_19 {dimension_numbers = #tpu.dot_dimension_numbers<[1], [0], [0], [1], [0, 0, 1, 1], [], []>} : vector<32x32xf32>, vector<32x32xf32>, vector<32x32xf32> -> vector<32x32xf32>
    %53 = vector.extract_strided_slice %0 {offsets = [3, 0], sizes = [1, 32], strides = [1, 1]} : vector<8x128xf32> to vector<1x32xf32>
    %54 = vector.broadcast %53 : vector<1x32xf32> to vector<32x32xf32>
    %55 = arith.addf %52, %54 : vector<32x32xf32>
    %cst_20 = arith.constant 0.000000e+00 : f32
    %56 = vector.broadcast %cst_20 : f32 to vector<32x32xf32>
    %57 = arith.maximumf %55, %56 : vector<32x32xf32>
    %c96 = arith.constant 96 : index
    %c0_21 = arith.constant 0 : index
    %58 = vector.load %arg4[%c96, %c0_21] : memref<128x32xf32, #tpu.memory_space<vmem>>, vector<32x32xf32>
    %cst_22 = arith.constant dense<0.000000e+00> : vector<32x32xf32>
    %59 = tpu.matmul %57, %58, %cst_22 {dimension_numbers = #tpu.dot_dimension_numbers<[1], [0], [0], [1], [0, 0, 1, 1], [], []>} : vector<32x32xf32>, vector<32x32xf32>, vector<32x32xf32> -> vector<32x32xf32>
    %60 = vector.extract_strided_slice %0 {offsets = [4, 0], sizes = [1, 32], strides = [1, 1]} : vector<8x128xf32> to vector<1x32xf32>
    %61 = vector.broadcast %60 : vector<1x32xf32> to vector<32x32xf32>
    %62 = arith.addf %59, %61 : vector<32x32xf32>
    %cst_23 = arith.constant 0.000000e+00 : f32
    %63 = vector.broadcast %cst_23 : f32 to vector<32x32xf32>
    %64 = arith.maximumf %62, %63 : vector<32x32xf32>
    %c0_24 = arith.constant 0 : index
    %c0_25 = arith.constant 0 : index
    %65 = vector.load %arg5[%c0_24, %c0_25] : memref<64x128xf32, #tpu.memory_space<vmem>>, vector<32x128xf32>
    %cst_26 = arith.constant dense<0.000000e+00> : vector<32x128xf32>
    %66 = tpu.matmul %64, %65, %cst_26 {dimension_numbers = #tpu.dot_dimension_numbers<[1], [0], [0], [1], [0, 0, 1, 1], [], []>} : vector<32x32xf32>, vector<32x128xf32>, vector<32x128xf32> -> vector<32x128xf32>
    %67 = vector.extract_strided_slice %0 {offsets = [5, 0], sizes = [1, 128], strides = [1, 1]} : vector<8x128xf32> to vector<1x128xf32>
    %68 = vector.broadcast %67 : vector<1x128xf32> to vector<32x128xf32>
    %69 = arith.addf %66, %68 : vector<32x128xf32>
    %c32_27 = arith.constant 32 : index
    %c0_28 = arith.constant 0 : index
    %70 = vector.load %arg5[%c32_27, %c0_28] : memref<64x128xf32, #tpu.memory_space<vmem>>, vector<32x128xf32>
    %cst_29 = arith.constant dense<0.000000e+00> : vector<32x128xf32>
    %71 = tpu.matmul %50, %70, %cst_29 {dimension_numbers = #tpu.dot_dimension_numbers<[1], [0], [0], [1], [0, 0, 1, 1], [], []>} : vector<32x32xf32>, vector<32x128xf32>, vector<32x128xf32> -> vector<32x128xf32>
    %72 = arith.addf %69, %71 : vector<32x128xf32>
    %c0_30 = arith.constant 0 : index
    %c0_31 = arith.constant 0 : index
    %73 = vector.load %arg7[%c0_30, %c0_31] : memref<32x128xf32, #tpu.memory_space<vmem>>, vector<32x128xf32>
    tpu.vector_store %arg7[%c0_30, %c0_31], %72 {strides = array<i32>} : memref<32x128xf32, #tpu.memory_space<vmem>>, vector<32x128xf32>,
    return
  }
}

</mosaic_0001>

<llo_original>
// kernel: custom-call.4
$region0: #{custom-call.4}
  %s0 = inlined_call_operand.vmem [shape: f32[2,64], index: 0, kind: output, shape index: {}]

// kernel: proposal_module_forward.1
$region0: #{proposal_module_forward.1}
  #allocation0 [shape = 'u32[]', space=smem, size = 0x4, offset = 0x4, fixed_abs, tag = 'smem constant byte address 0x4 - core index']
  #allocation1 [shape = 'u32[144,128]{1,0:T(1,128)}', space=vmem, size = 0x12000, scoped, tag = 'internal scratch']
  %s0 = inlined_call_operand.vmem [shape: s32[256,1], index: 0, kind: input, shape index: {}]
  %s1 = inlined_call_operand.vmem [shape: s32[256,1], index: 1, kind: input, shape index: {}]
  %s2 = inlined_call_operand.vmem [shape: f32[160,35], index: 2, kind: input, shape index: {}]
  %s3 = inlined_call_operand.vmem [shape: f32[35,32], index: 3, kind: input, shape index: {}]
  %s4 = inlined_call_operand.vmem [shape: f32[128,32], index: 4, kind: input, shape index: {}]
  %s5 = inlined_call_operand.vmem [shape: f32[64,128], index: 5, kind: input, shape index: {}]
  %s6 = inlined_call_operand.vmem [shape: f32[8,128], index: 6, kind: input, shape index: {}]
  %s7 = inlined_call_operand.vmem [shape: f32[32,128], index: 7, kind: output, shape index: {}]
  %s8 = sld [smem:[#allocation0]]
  $region38: #{proposal_module_forward.1} parent=0
    _
  %s10 = ssub.s32 1, %s8
  %s11 = scalar_select 0, %s10, %s8
  // Predicated region
  $region2: #{proposal_module_forward.1} parent=0 // pred_check
    _
  $region3: #{proposal_module_forward.1} parent=0 // pred_check_branch
    %13 = sbr.rel (0) target = $region5
  $region4: #{proposal_module_forward.1} parent=0 // pred_region
    _
  $region5: #{proposal_module_forward.1} parent=0 // pred_fallthru
    _
  // Predicated region
  $region6: #{proposal_module_forward.1} parent=0 // pred_check
    _
  $region7: #{proposal_module_forward.1} parent=0 // pred_check_branch
    %15 = sbr.rel (0) target = $region9
  $region8: #{proposal_module_forward.1} parent=0 // pred_region
    _
  $region9: #{proposal_module_forward.1} parent=0 // pred_fallthru
    _
  // Predicated region
  $region10: #{proposal_module_forward.1} parent=0 // pred_check
    _
  $region11: #{proposal_module_forward.1} parent=0 // pred_check_branch
    %17 = sbr.rel (0) target = $region13
  $region12: #{proposal_module_forward.1} parent=0 // pred_region
    _
  $region13: #{proposal_module_forward.1} parent=0 // pred_fallthru
    _
  // Predicated region
  $region14: #{proposal_module_forward.1} parent=0 // pred_check
    _
  $region15: #{proposal_module_forward.1} parent=0 // pred_check_branch
    %19 = sbr.rel (0) target = $region17
  $region16: #{proposal_module_forward.1} parent=0 // pred_region
    _
  $region17: #{proposal_module_forward.1} parent=0 // pred_fallthru
    _
  // Predicated region
  $region18: #{proposal_module_forward.1} parent=0 // pred_check
    _
  $region19: #{proposal_module_forward.1} parent=0 // pred_check_branch
    %21 = sbr.rel (0) target = $region21
  $region20: #{proposal_module_forward.1} parent=0 // pred_region
    _
  $region21: #{proposal_module_forward.1} parent=0 // pred_fallthru
    _
  // Predicated region
  $region22: #{proposal_module_forward.1} parent=0 // pred_check
    _
  $region23: #{proposal_module_forward.1} parent=0 // pred_check_branch
    %23 = sbr.rel (0) target = $region25
  $region24: #{proposal_module_forward.1} parent=0 // pred_region
    _
  $region25: #{proposal_module_forward.1} parent=0 // pred_fallthru
    _
  // Predicated region
  $region26: #{proposal_module_forward.1} parent=0 // pred_check
    _
  $region27: #{proposal_module_forward.1} parent=0 // pred_check_branch
    %25 = sbr.rel (0) target = $region29
  $region28: #{proposal_module_forward.1} parent=0 // pred_region
    _
  $region29: #{proposal_module_forward.1} parent=0 // pred_fallthru
    _
  %v26 = vld [vmem:[%s6] sm:$0xff]
  %v27 = vlaneseq
  %v28 = vand.u32 %v27, 127
  %v29 = vadd.s32 %v28, 128
  %v30 = vld [vmem:[%s0] sm:$0xff]
  %v31 = vld [vmem:[%s0 + $0x8] sm:$0xff]
  %v32 = vld [vmem:[%s0 + $0x10] sm:$0xff]
  %v33 = vld [vmem:[%s0 + $0x18] sm:$0xff]
  %v34 = vld [vmem:[%s0 + $0x20] sm:$0xff]
  %v35 = vld [vmem:[%s0 + $0x28] sm:$0xff]
  %v36 = vld [vmem:[%s0 + $0x30] sm:$0xff]
  %v37 = vld [vmem:[%s0 + $0x38] sm:$0xff]
  %v38 = vld [vmem:[%s0 + $0x40] sm:$0xff]
  %v39 = vld [vmem:[%s0 + $0x48] sm:$0xff]
  %v40 = vld [vmem:[%s0 + $0x50] sm:$0xff]
  %v41 = vld [vmem:[%s0 + $0x58] sm:$0xff]
  %v42 = vld [vmem:[%s0 + $0x60] sm:$0xff]
  %v43 = vld [vmem:[%s0 + $0x68] sm:$0xff]
  %v44 = vld [vmem:[%s0 + $0x70] sm:$0xff]
  %v45 = vld [vmem:[%s0 + $0x78] sm:$0xff]
  %v46 = vld [vmem:[%s0 + $0x80] sm:$0xff]
  %v47 = vld [vmem:[%s0 + $0x88] sm:$0xff]
  %v48 = vld [vmem:[%s0 + $0x90] sm:$0xff]
  %v49 = vld [vmem:[%s0 + $0x98] sm:$0xff]
  %v50 = vld [vmem:[%s0 + $0xa0] sm:$0xff]
  %v51 = vld [vmem:[%s0 + $0xa8] sm:$0xff]
  %v52 = vld [vmem:[%s0 + $0xb0] sm:$0xff]
  %v53 = vld [vmem:[%s0 + $0xb8] sm:$0xff]
  %v54 = vld [vmem:[%s0 + $0xc0] sm:$0xff]
  %v55 = vld [vmem:[%s0 + $0xc8] sm:$0xff]
  %v56 = vld [vmem:[%s0 + $0xd0] sm:$0xff]
  %v57 = vld [vmem:[%s0 + $0xd8] sm:$0xff]
  %v58 = vld [vmem:[%s0 + $0xe0] sm:$0xff]
  %v59 = vld [vmem:[%s0 + $0xe8] sm:$0xff]
  %v60 = vld [vmem:[%s0 + $0xf0] sm:$0xff]
  %v61 = vld [vmem:[%s0 + $0xf8] sm:$0xff]
  %62 = vset.pattern.permute.xlu0 0
  %63 = vperm.xlu0 %62, %v30
  %v64 = vpop.permute.xlu0 %63
  %65 = vset.pattern.permute.xlu0 0
  %66 = vperm.xlu0 %65, %v31
  %v67 = vpop.permute.xlu0 %66
  %68 = vset.pattern.permute.xlu0 0
  %69 = vperm.xlu0 %68, %v32
  %v70 = vpop.permute.xlu0 %69
  %71 = vset.pattern.permute.xlu0 0
  %72 = vperm.xlu0 %71, %v33
  %v73 = vpop.permute.xlu0 %72
  %74 = vset.pattern.permute.xlu0 0
  %75 = vperm.xlu0 %74, %v34
  %v76 = vpop.permute.xlu0 %75
  %77 = vset.pattern.permute.xlu0 0
  %78 = vperm.xlu0 %77, %v35
  %v79 = vpop.permute.xlu0 %78
  %80 = vset.pattern.permute.xlu0 0
  %81 = vperm.xlu0 %80, %v36
  %v82 = vpop.permute.xlu0 %81
  %83 = vset.pattern.permute.xlu0 0
  %84 = vperm.xlu0 %83, %v37
  %v85 = vpop.permute.xlu0 %84
  %86 = vset.pattern.permute.xlu0 0
  %87 = vperm.xlu0 %86, %v38
  %v88 = vpop.permute.xlu0 %87
  %89 = vset.pattern.permute.xlu0 0
  %90 = vperm.xlu0 %89, %v39
  %v91 = vpop.permute.xlu0 %90
  %92 = vset.pattern.permute.xlu0 0
  %93 = vperm.xlu0 %92, %v40
  %v94 = vpop.permute.xlu0 %93
  %95 = vset.pattern.permute.xlu0 0
  %96 = vperm.xlu0 %95, %v41
  %v97 = vpop.permute.xlu0 %96
  %98 = vset.pattern.permute.xlu0 0
  %99 = vperm.xlu0 %98, %v42
  %v100 = vpop.permute.xlu0 %99
  %101 = vset.pattern.permute.xlu0 0
  %102 = vperm.xlu0 %101, %v43
  %v103 = vpop.permute.xlu0 %102
  %104 = vset.pattern.permute.xlu0 0
  %105 = vperm.xlu0 %104, %v44
  %v106 = vpop.permute.xlu0 %105
  %107 = vset.pattern.permute.xlu0 0
  %108 = vperm.xlu0 %107, %v45
  %v109 = vpop.permute.xlu0 %108
  %110 = vset.pattern.permute.xlu0 0
  %111 = vperm.xlu0 %110, %v46
  %v112 = vpop.permute.xlu0 %111
  %113 = vset.pattern.permute.xlu0 0
  %114 = vperm.xlu0 %113, %v47
  %v115 = vpop.permute.xlu0 %114
  %116 = vset.pattern.permute.xlu0 0
  %117 = vperm.xlu0 %116, %v48
  %v118 = vpop.permute.xlu0 %117
  %119 = vset.pattern.permute.xlu0 0
  %120 = vperm.xlu0 %119, %v49
  %v121 = vpop.permute.xlu0 %120
  %122 = vset.pattern.permute.xlu0 0
  %123 = vperm.xlu0 %122, %v50
  %v124 = vpop.permute.xlu0 %123
  %125 = vset.pattern.permute.xlu0 0
  %126 = vperm.xlu0 %125, %v51
  %v127 = vpop.permute.xlu0 %126
  %128 = vset.pattern.permute.xlu0 0
  %129 = vperm.xlu0 %128, %v52
  %v130 = vpop.permute.xlu0 %129
  %131 = vset.pattern.permute.xlu0 0
  %132 = vperm.xlu0 %131, %v53
  %v133 = vpop.permute.xlu0 %132
  %134 = vset.pattern.permute.xlu0 0
  %135 = vperm.xlu0 %134, %v54
  %v136 = vpop.permute.xlu0 %135
  %137 = vset.pattern.permute.xlu0 0
  %138 = vperm.xlu0 %137, %v55
  %v139 = vpop.permute.xlu0 %138
  %140 = vset.pattern.permute.xlu0 0
  %141 = vperm.xlu0 %140, %v56
  %v142 = vpop.permute.xlu0 %141
  %143 = vset.pattern.permute.xlu0 0
  %144 = vperm.xlu0 %143, %v57
  %v145 = vpop.permute.xlu0 %144
  %146 = vset.pattern.permute.xlu0 0
  %147 = vperm.xlu0 %146, %v58
  %v148 = vpop.permute.xlu0 %147
  %149 = vset.pattern.permute.xlu0 0
  %150 = vperm.xlu0 %149, %v59
  %v151 = vpop.permute.xlu0 %150
  %152 = vset.pattern.permute.xlu0 0
  %153 = vperm.xlu0 %152, %v60
  %v154 = vpop.permute.xlu0 %153
  %155 = vset.pattern.permute.xlu0 0
  %156 = vperm.xlu0 %155, %v61
  %v157 = vpop.permute.xlu0 %156
  %vm158 = vcmp.eq.s32.totalorder %v28, %v64
  %vm159 = vcmp.eq.s32.totalorder %v29, %v64
  %vm160 = vcmp.eq.s32.totalorder %v28, %v67
  %vm161 = vcmp.eq.s32.totalorder %v29, %v67
  %vm162 = vcmp.eq.s32.totalorder %v28, %v70
  %vm163 = vcmp.eq.s32.totalorder %v29, %v70
  %vm164 = vcmp.eq.s32.totalorder %v28, %v73
  %vm165 = vcmp.eq.s32.totalorder %v29, %v73
  %vm166 = vcmp.eq.s32.totalorder %v28, %v76
  %vm167 = vcmp.eq.s32.totalorder %v29, %v76
  %vm168 = vcmp.eq.s32.totalorder %v28, %v79
  %vm169 = vcmp.eq.s32.totalorder %v29, %v79
  %vm170 = vcmp.eq.s32.totalorder %v28, %v82
  %vm171 = vcmp.eq.s32.totalorder %v29, %v82
  %vm172 = vcmp.eq.s32.totalorder %v28, %v85
  %vm173 = vcmp.eq.s32.totalorder %v29, %v85
  %vm174 = vcmp.eq.s32.totalorder %v28, %v88
  %vm175 = vcmp.eq.s32.totalorder %v29, %v88
  %vm176 = vcmp.eq.s32.totalorder %v28, %v91
  %vm177 = vcmp.eq.s32.totalorder %v29, %v91
  %vm178 = vcmp.eq.s32.totalorder %v28, %v94
  %vm179 = vcmp.eq.s32.totalorder %v29, %v94
  %vm180 = vcmp.eq.s32.totalorder %v28, %v97
  %vm181 = vcmp.eq.s32.totalorder %v29, %v97
  %vm182 = vcmp.eq.s32.totalorder %v28, %v100
  %vm183 = vcmp.eq.s32.totalorder %v29, %v100
  %vm184 = vcmp.eq.s32.totalorder %v28, %v103
  %vm185 = vcmp.eq.s32.totalorder %v29, %v103
  %vm186 = vcmp.eq.s32.totalorder %v28, %v106
  %vm187 = vcmp.eq.s32.totalorder %v29, %v106
  %vm188 = vcmp.eq.s32.totalorder %v28, %v109
  %vm189 = vcmp.eq.s32.totalorder %v29, %v109
  %vm190 = vcmp.eq.s32.totalorder %v28, %v112
  %vm191 = vcmp.eq.s32.totalorder %v29, %v112
  %vm192 = vcmp.eq.s32.totalorder %v28, %v115
  %vm193 = vcmp.eq.s32.totalorder %v29, %v115
  %vm194 = vcmp.eq.s32.totalorder %v28, %v118
  %vm195 = vcmp.eq.s32.totalorder %v29, %v118
  %vm196 = vcmp.eq.s32.totalorder %v28, %v121
  %vm197 = vcmp.eq.s32.totalorder %v29, %v121
  %vm198 = vcmp.eq.s32.totalorder %v28, %v124
  %vm199 = vcmp.eq.s32.totalorder %v29, %v124
  %vm200 = vcmp.eq.s32.totalorder %v28, %v127
  %vm201 = vcmp.eq.s32.totalorder %v29, %v127
  %vm202 = vcmp.eq.s32.totalorder %v28, %v130
  %vm203 = vcmp.eq.s32.totalorder %v29, %v130
  %vm204 = vcmp.eq.s32.totalorder %v28, %v133
  %vm205 = vcmp.eq.s32.totalorder %v29, %v133
  %vm206 = vcmp.eq.s32.totalorder %v28, %v136
  %vm207 = vcmp.eq.s32.totalorder %v29, %v136
  %vm208 = vcmp.eq.s32.totalorder %v28, %v139
  %vm209 = vcmp.eq.s32.totalorder %v29, %v139
  %vm210 = vcmp.eq.s32.totalorder %v28, %v142
  %vm211 = vcmp.eq.s32.totalorder %v29, %v142
  %vm212 = vcmp.eq.s32.totalorder %v28, %v145
  %vm213 = vcmp.eq.s32.totalorder %v29, %v145
  %vm214 = vcmp.eq.s32.totalorder %v28, %v148
  %vm215 = vcmp.eq.s32.totalorder %v29, %v148
  %vm216 = vcmp.eq.s32.totalorder %v28, %v151
  %vm217 = vcmp.eq.s32.totalorder %v29, %v151
  %vm218 = vcmp.eq.s32.totalorder %v28, %v154
  %vm219 = vcmp.eq.s32.totalorder %v29, %v154
  %vm220 = vcmp.eq.s32.totalorder %v28, %v157
  %vm221 = vcmp.eq.s32.totalorder %v29, %v157
  %v222 = vsel %vm158, 1, 0
  %v223 = vsel %vm159, 1, 0
  %v224 = vsel %vm160, 1, 0
  %v225 = vsel %vm161, 1, 0
  %v226 = vsel %vm162, 1, 0
  %v227 = vsel %vm163, 1, 0
  %v228 = vsel %vm164, 1, 0
  %v229 = vsel %vm165, 1, 0
  %v230 = vsel %vm166, 1, 0
  %v231 = vsel %vm167, 1, 0
  %v232 = vsel %vm168, 1, 0
  %v233 = vsel %vm169, 1, 0
  %v234 = vsel %vm170, 1, 0
  %v235 = vsel %vm171, 1, 0
  %v236 = vsel %vm172, 1, 0
  %v237 = vsel %vm173, 1, 0
  %v238 = vsel %vm174, 1, 0
  %v239 = vsel %vm175, 1, 0
  %v240 = vsel %vm176, 1, 0
  %v241 = vsel %vm177, 1, 0
  %v242 = vsel %vm178, 1, 0
  %v243 = vsel %vm179, 1, 0
  %v244 = vsel %vm180, 1, 0
  %v245 = vsel %vm181, 1, 0
  %v246 = vsel %vm182, 1, 0
  %v247 = vsel %vm183, 1, 0
  %v248 = vsel %vm184, 1, 0
  %v249 = vsel %vm185, 1, 0
  %v250 = vsel %vm186, 1, 0
  %v251 = vsel %vm187, 1, 0
  %v252 = vsel %vm188, 1, 0
  %v253 = vsel %vm189, 1, 0
  %v254 = vsel %vm190, 1, 0
  %v255 = vsel %vm191, 1, 0
  %v256 = vsel %vm192, 1, 0
  %v257 = vsel %vm193, 1, 0
  %v258 = vsel %vm194, 1, 0
  %v259 = vsel %vm195, 1, 0
  %v260 = vsel %vm196, 1, 0
  %v261 = vsel %vm197, 1, 0
  %v262 = vsel %vm198, 1, 0
  %v263 = vsel %vm199, 1, 0
  %v264 = vsel %vm200, 1, 0
  %v265 = vsel %vm201, 1, 0
  %v266 = vsel %vm202, 1, 0
  %v267 = vsel %vm203, 1, 0
  %v268 = vsel %vm204, 1, 0
  %v269 = vsel %vm205, 1, 0
  %v270 = vsel %vm206, 1, 0
  %v271 = vsel %vm207, 1, 0
  %v272 = vsel %vm208, 1, 0
  %v273 = vsel %vm209, 1, 0
  %v274 = vsel %vm210, 1, 0
  %v275 = vsel %vm211, 1, 0
  %v276 = vsel %vm212, 1, 0
  %v277 = vsel %vm213, 1, 0
  %v278 = vsel %vm214, 1, 0
  %v279 = vsel %vm215, 1, 0
  %v280 = vsel %vm216, 1, 0
  %v281 = vsel %vm217, 1, 0
  %v282 = vsel %vm218, 1, 0
  %v283 = vsel %vm219, 1, 0
  %v284 = vsel %vm220, 1, 0
  %v285 = vsel %vm221, 1, 0
  %v286 = vcvt.s32.f32 %v222
  %v287 = vcvt.s32.f32 %v223
  %v288 = vcvt.s32.f32 %v224
  %v289 = vcvt.s32.f32 %v225
  %v290 = vcvt.s32.f32 %v226
  %v291 = vcvt.s32.f32 %v227
  %v292 = vcvt.s32.f32 %v228
  %v293 = vcvt.s32.f32 %v229
  %v294 = vcvt.s32.f32 %v230
  %v295 = vcvt.s32.f32 %v231
  %v296 = vcvt.s32.f32 %v232
  %v297 = vcvt.s32.f32 %v233
  %v298 = vcvt.s32.f32 %v234
  %v299 = vcvt.s32.f32 %v235
  %v300 = vcvt.s32.f32 %v236
  %v301 = vcvt.s32.f32 %v237
  %v302 = vcvt.s32.f32 %v238
  %v303 = vcvt.s32.f32 %v239
  %v304 = vcvt.s32.f32 %v240
  %v305 = vcvt.s32.f32 %v241
  %v306 = vcvt.s32.f32 %v242
  %v307 = vcvt.s32.f32 %v243
  %v308 = vcvt.s32.f32 %v244
  %v309 = vcvt.s32.f32 %v245
  %v310 = vcvt.s32.f32 %v246
  %v311 = vcvt.s32.f32 %v247
  %v312 = vcvt.s32.f32 %v248
  %v313 = vcvt.s32.f32 %v249
  %v314 = vcvt.s32.f32 %v250
  %v315 = vcvt.s32.f32 %v251
  %v316 = vcvt.s32.f32 %v252
  %v317 = vcvt.s32.f32 %v253
  %v318 = vcvt.s32.f32 %v254
  %v319 = vcvt.s32.f32 %v255
  %v320 = vcvt.s32.f32 %v256
  %v321 = vcvt.s32.f32 %v257
  %v322 = vcvt.s32.f32 %v258
  %v323 = vcvt.s32.f32 %v259
  %v324 = vcvt.s32.f32 %v260
  %v325 = vcvt.s32.f32 %v261
  %v326 = vcvt.s32.f32 %v262
  %v327 = vcvt.s32.f32 %v263
  %v328 = vcvt.s32.f32 %v264
  %v329 = vcvt.s32.f32 %v265
  %v330 = vcvt.s32.f32 %v266
  %v331 = vcvt.s32.f32 %v267
  %v332 = vcvt.s32.f32 %v268
  %v333 = vcvt.s32.f32 %v269
  %v334 = vcvt.s32.f32 %v270
  %v335 = vcvt.s32.f32 %v271
  %v336 = vcvt.s32.f32 %v272
  %v337 = vcvt.s32.f32 %v273
  %v338 = vcvt.s32.f32 %v274
  %v339 = vcvt.s32.f32 %v275
  %v340 = vcvt.s32.f32 %v276
  %v341 = vcvt.s32.f32 %v277
  %v342 = vcvt.s32.f32 %v278
  %v343 = vcvt.s32.f32 %v279
  %v344 = vcvt.s32.f32 %v280
  %v345 = vcvt.s32.f32 %v281
  %v346 = vcvt.s32.f32 %v282
  %v347 = vcvt.s32.f32 %v283
  %v348 = vcvt.s32.f32 %v284
  %v349 = vcvt.s32.f32 %v285
  %v350 = vld [vmem:[%s1] sm:$0xff]
  %v351 = vld [vmem:[%s1 + $0x8] sm:$0xff]
  %v352 = vld [vmem:[%s1 + $0x10] sm:$0xff]
  %v353 = vld [vmem:[%s1 + $0x18] sm:$0xff]
  %v354 = vld [vmem:[%s1 + $0x20] sm:$0xff]
  %v355 = vld [vmem:[%s1 + $0x28] sm:$0xff]
  %v356 = vld [vmem:[%s1 + $0x30] sm:$0xff]
  %v357 = vld [vmem:[%s1 + $0x38] sm:$0xff]
  %v358 = vld [vmem:[%s1 + $0x40] sm:$0xff]
  %v359 = vld [vmem:[%s1 + $0x48] sm:$0xff]
  %v360 = vld [vmem:[%s1 + $0x50] sm:$0xff]
  %v361 = vld [vmem:[%s1 + $0x58] sm:$0xff]
  %v362 = vld [vmem:[%s1 + $0x60] sm:$0xff]
  %v363 = vld [vmem:[%s1 + $0x68] sm:$0xff]
  %v364 = vld [vmem:[%s1 + $0x70] sm:$0xff]
  %v365 = vld [vmem:[%s1 + $0x78] sm:$0xff]
  %v366 = vld [vmem:[%s1 + $0x80] sm:$0xff]
  %v367 = vld [vmem:[%s1 + $0x88] sm:$0xff]
  %v368 = vld [vmem:[%s1 + $0x90] sm:$0xff]
  %v369 = vld [vmem:[%s1 + $0x98] sm:$0xff]
  %v370 = vld [vmem:[%s1 + $0xa0] sm:$0xff]
  %v371 = vld [vmem:[%s1 + $0xa8] sm:$0xff]
  %v372 = vld [vmem:[%s1 + $0xb0] sm:$0xff]
  %v373 = vld [vmem:[%s1 + $0xb8] sm:$0xff]
  %v374 = vld [vmem:[%s1 + $0xc0] sm:$0xff]
  %v375 = vld [vmem:[%s1 + $0xc8] sm:$0xff]
  %v376 = vld [vmem:[%s1 + $0xd0] sm:$0xff]
  %v377 = vld [vmem:[%s1 + $0xd8] sm:$0xff]
  %v378 = vld [vmem:[%s1 + $0xe0] sm:$0xff]
  %v379 = vld [vmem:[%s1 + $0xe8] sm:$0xff]
  %v380 = vld [vmem:[%s1 + $0xf0] sm:$0xff]
  %v381 = vld [vmem:[%s1 + $0xf8] sm:$0xff]
  %382 = vset.pattern.permute.xlu0 0
  %383 = vperm.xlu0 %382, %v350
  %v384 = vpop.permute.xlu0 %383
  %385 = vset.pattern.permute.xlu0 0
  %386 = vperm.xlu0 %385, %v351
  %v387 = vpop.permute.xlu0 %386
  %388 = vset.pattern.permute.xlu0 0
  %389 = vperm.xlu0 %388, %v352
  %v390 = vpop.permute.xlu0 %389
  %391 = vset.pattern.permute.xlu0 0
  %392 = vperm.xlu0 %391, %v353
  %v393 = vpop.permute.xlu0 %392
  %394 = vset.pattern.permute.xlu0 0
  %395 = vperm.xlu0 %394, %v354
  %v396 = vpop.permute.xlu0 %395
  %397 = vset.pattern.permute.xlu0 0
  %398 = vperm.xlu0 %397, %v355
  %v399 = vpop.permute.xlu0 %398
  %400 = vset.pattern.permute.xlu0 0
  %401 = vperm.xlu0 %400, %v356
  %v402 = vpop.permute.xlu0 %401
  %403 = vset.pattern.permute.xlu0 0
  %404 = vperm.xlu0 %403, %v357
  %v405 = vpop.permute.xlu0 %404
  %406 = vset.pattern.permute.xlu0 0
  %407 = vperm.xlu0 %406, %v358
  %v408 = vpop.permute.xlu0 %407
  %409 = vset.pattern.permute.xlu0 0
  %410 = vperm.xlu0 %409, %v359
  %v411 = vpop.permute.xlu0 %410
  %412 = vset.pattern.permute.xlu0 0
  %413 = vperm.xlu0 %412, %v360
  %v414 = vpop.permute.xlu0 %413
  %415 = vset.pattern.permute.xlu0 0
  %416 = vperm.xlu0 %415, %v361
  %v417 = vpop.permute.xlu0 %416
  %418 = vset.pattern.permute.xlu0 0
  %419 = vperm.xlu0 %418, %v362
  %v420 = vpop.permute.xlu0 %419
  %421 = vset.pattern.permute.xlu0 0
  %422 = vperm.xlu0 %421, %v363
  %v423 = vpop.permute.xlu0 %422
  %424 = vset.pattern.permute.xlu0 0
  %425 = vperm.xlu0 %424, %v364
  %v426 = vpop.permute.xlu0 %425
  %427 = vset.pattern.permute.xlu0 0
  %428 = vperm.xlu0 %427, %v365
  %v429 = vpop.permute.xlu0 %428
  %430 = vset.pattern.permute.xlu0 0
  %431 = vperm.xlu0 %430, %v366
  %v432 = vpop.permute.xlu0 %431
  %433 = vset.pattern.permute.xlu0 0
  %434 = vperm.xlu0 %433, %v367
  %v435 = vpop.permute.xlu0 %434
  %436 = vset.pattern.permute.xlu0 0
  %437 = vperm.xlu0 %436, %v368
  %v438 = vpop.permute.xlu0 %437
  %439 = vset.pattern.permute.xlu0 0
  %440 = vperm.xlu0 %439, %v369
  %v441 = vpop.permute.xlu0 %440
  %442 = vset.pattern.permute.xlu0 0
  %443 = vperm.xlu0 %442, %v370
  %v444 = vpop.permute.xlu0 %443
  %445 = vset.pattern.permute.xlu0 0
  %446 = vperm.xlu0 %445, %v371
  %v447 = vpop.permute.xlu0 %446
  %448 = vset.pattern.permute.xlu0 0
  %449 = vperm.xlu0 %448, %v372
  %v450 = vpop.permute.xlu0 %449
  %451 = vset.pattern.permute.xlu0 0
  %452 = vperm.xlu0 %451, %v373
  %v453 = vpop.permute.xlu0 %452
  %454 = vset.pattern.permute.xlu0 0
  %455 = vperm.xlu0 %454, %v374
  %v456 = vpop.permute.xlu0 %455
  %457 = vset.pattern.permute.xlu0 0
  %458 = vperm.xlu0 %457, %v375
  %v459 = vpop.permute.xlu0 %458
  %460 = vset.pattern.permute.xlu0 0
  %461 = vperm.xlu0 %460, %v376
  %v462 = vpop.permute.xlu0 %461
  %463 = vset.pattern.permute.xlu0 0
  %464 = vperm.xlu0 %463, %v377
  %v465 = vpop.permute.xlu0 %464
  %466 = vset.pattern.permute.xlu0 0
  %467 = vperm.xlu0 %466, %v378
  %v468 = vpop.permute.xlu0 %467
  %469 = vset.pattern.permute.xlu0 0
  %470 = vperm.xlu0 %469, %v379
  %v471 = vpop.permute.xlu0 %470
  %472 = vset.pattern.permute.xlu0 0
  %473 = vperm.xlu0 %472, %v380
  %v474 = vpop.permute.xlu0 %473
  %475 = vset.pattern.permute.xlu0 0
  %476 = vperm.xlu0 %475, %v381
  %v477 = vpop.permute.xlu0 %476
  %vm478 = vcmp.eq.s32.totalorder %v28, %v384
  %vm479 = vcmp.eq.s32.totalorder %v29, %v384
  %vm480 = vcmp.eq.s32.totalorder %v28, %v387
  %vm481 = vcmp.eq.s32.totalorder %v29, %v387
  %vm482 = vcmp.eq.s32.totalorder %v28, %v390
  %vm483 = vcmp.eq.s32.totalorder %v29, %v390
  %vm484 = vcmp.eq.s32.totalorder %v28, %v393
  %vm485 = vcmp.eq.s32.totalorder %v29, %v393
  %vm486 = vcmp.eq.s32.totalorder %v28, %v396
  %vm487 = vcmp.eq.s32.totalorder %v29, %v396
  %vm488 = vcmp.eq.s32.totalorder %v28, %v399
  %vm489 = vcmp.eq.s32.totalorder %v29, %v399
  %vm490 = vcmp.eq.s32.totalorder %v28, %v402
  %vm491 = vcmp.eq.s32.totalorder %v29, %v402
  %vm492 = vcmp.eq.s32.totalorder %v28, %v405
  %vm493 = vcmp.eq.s32.totalorder %v29, %v405
  %vm494 = vcmp.eq.s32.totalorder %v28, %v408
  %vm495 = vcmp.eq.s32.totalorder %v29, %v408
  %vm496 = vcmp.eq.s32.totalorder %v28, %v411
  %vm497 = vcmp.eq.s32.totalorder %v29, %v411
  %vm498 = vcmp.eq.s32.totalorder %v28, %v414
  %vm499 = vcmp.eq.s32.totalorder %v29, %v414
  %vm500 = vcmp.eq.s32.totalorder %v28, %v417
  %vm501 = vcmp.eq.s32.totalorder %v29, %v417
  %vm502 = vcmp.eq.s32.totalorder %v28, %v420
  %vm503 = vcmp.eq.s32.totalorder %v29, %v420
  %vm504 = vcmp.eq.s32.totalorder %v28, %v423
  %vm505 = vcmp.eq.s32.totalorder %v29, %v423
  %vm506 = vcmp.eq.s32.totalorder %v28, %v426
  %vm507 = vcmp.eq.s32.totalorder %v29, %v426
  %vm508 = vcmp.eq.s32.totalorder %v28, %v429
  %vm509 = vcmp.eq.s32.totalorder %v29, %v429
  %vm510 = vcmp.eq.s32.totalorder %v28, %v432
  %vm511 = vcmp.eq.s32.totalorder %v29, %v432
  %vm512 = vcmp.eq.s32.totalorder %v28, %v435
  %vm513 = vcmp.eq.s32.totalorder %v29, %v435
  %vm514 = vcmp.eq.s32.totalorder %v28, %v438
  %vm515 = vcmp.eq.s32.totalorder %v29, %v438
  %vm516 = vcmp.eq.s32.totalorder %v28, %v441
  %vm517 = vcmp.eq.s32.totalorder %v29, %v441
  %vm518 = vcmp.eq.s32.totalorder %v28, %v444
  %vm519 = vcmp.eq.s32.totalorder %v29, %v444
  %vm520 = vcmp.eq.s32.totalorder %v28, %v447
  %vm521 = vcmp.eq.s32.totalorder %v29, %v447
  %vm522 = vcmp.eq.s32.totalorder %v28, %v450
  %vm523 = vcmp.eq.s32.totalorder %v29, %v450
  %vm524 = vcmp.eq.s32.totalorder %v28, %v453
  %vm525 = vcmp.eq.s32.totalorder %v29, %v453
  %vm526 = vcmp.eq.s32.totalorder %v28, %v456
  %vm527 = vcmp.eq.s32.totalorder %v29, %v456
  %vm528 = vcmp.eq.s32.totalorder %v28, %v459
  %vm529 = vcmp.eq.s32.totalorder %v29, %v459
  %vm530 = vcmp.eq.s32.totalorder %v28, %v462
  %vm531 = vcmp.eq.s32.totalorder %v29, %v462
  %vm532 = vcmp.eq.s32.totalorder %v28, %v465
  %vm533 = vcmp.eq.s32.totalorder %v29, %v465
  %vm534 = vcmp.eq.s32.totalorder %v28, %v468
  %vm535 = vcmp.eq.s32.totalorder %v29, %v468
  %vm536 = vcmp.eq.s32.totalorder %v28, %v471
  %vm537 = vcmp.eq.s32.totalorder %v29, %v471
  %vm538 = vcmp.eq.s32.totalorder %v28, %v474
  %vm539 = vcmp.eq.s32.totalorder %v29, %v474
  %vm540 = vcmp.eq.s32.totalorder %v28, %v477
  %vm541 = vcmp.eq.s32.totalorder %v29, %v477
  %v542 = vsel %vm478, 1, 0
  %v543 = vsel %vm479, 1, 0
  %v544 = vsel %vm480, 1, 0
  %v545 = vsel %vm481, 1, 0
  %v546 = vsel %vm482, 1, 0
  %v547 = vsel %vm483, 1, 0
  %v548 = vsel %vm484, 1, 0
  %v549 = vsel %vm485, 1, 0
  %v550 = vsel %vm486, 1, 0
  %v551 = vsel %vm487, 1, 0
  %v552 = vsel %vm488, 1, 0
  %v553 = vsel %vm489, 1, 0
  %v554 = vsel %vm490, 1, 0
  %v555 = vsel %vm491, 1, 0
  %v556 = vsel %vm492, 1, 0
  %v557 = vsel %vm493, 1, 0
  %v558 = vsel %vm494, 1, 0
  %v559 = vsel %vm495, 1, 0
  %v560 = vsel %vm496, 1, 0
  %v561 = vsel %vm497, 1, 0
  %v562 = vsel %vm498, 1, 0
  %v563 = vsel %vm499, 1, 0
  %v564 = vsel %vm500, 1, 0
  %v565 = vsel %vm501, 1, 0
  %v566 = vsel %vm502, 1, 0
  %v567 = vsel %vm503, 1, 0
  %v568 = vsel %vm504, 1, 0
  %v569 = vsel %vm505, 1, 0
  %v570 = vsel %vm506, 1, 0
  %v571 = vsel %vm507, 1, 0
  %v572 = vsel %vm508, 1, 0
  %v573 = vsel %vm509, 1, 0
  %v574 = vsel %vm510, 1, 0
  %v575 = vsel %vm511, 1, 0
  %v576 = vsel %vm512, 1, 0
  %v577 = vsel %vm513, 1, 0
  %v578 = vsel %vm514, 1, 0
  %v579 = vsel %vm515, 1, 0
  %v580 = vsel %vm516, 1, 0
  %v581 = vsel %vm517, 1, 0
  %v582 = vsel %vm518, 1, 0
  %v583 = vsel %vm519, 1, 0
  %v584 = vsel %vm520, 1, 0
  %v585 = vsel %vm521, 1, 0
  %v586 = vsel %vm522, 1, 0
  %v587 = vsel %vm523, 1, 0
  %v588 = vsel %vm524, 1, 0
  %v589 = vsel %vm525, 1, 0
  %v590 = vsel %vm526, 1, 0
  %v591 = vsel %vm527, 1, 0
  %v592 = vsel %vm528, 1, 0
  %v593 = vsel %vm529, 1, 0
  %v594 = vsel %vm530, 1, 0
  %v595 = vsel %vm531, 1, 0
  %v596 = vsel %vm532, 1, 0
  %v597 = vsel %vm533, 1, 0
  %v598 = vsel %vm534, 1, 0
  %v599 = vsel %vm535, 1, 0
  %v600 = vsel %vm536, 1, 0
  %v601 = vsel %vm537, 1, 0
  %v602 = vsel %vm538, 1, 0
  %v603 = vsel %vm539, 1, 0
  %v604 = vsel %vm540, 1, 0
  %v605 = vsel %vm541, 1, 0
  %v606 = vcvt.s32.f32 %v542
  %v607 = vcvt.s32.f32 %v543
  %v608 = vcvt.s32.f32 %v544
  %v609 = vcvt.s32.f32 %v545
  %v610 = vcvt.s32.f32 %v546
  %v611 = vcvt.s32.f32 %v547
  %v612 = vcvt.s32.f32 %v548
  %v613 = vcvt.s32.f32 %v549
  %v614 = vcvt.s32.f32 %v550
  %v615 = vcvt.s32.f32 %v551
  %v616 = vcvt.s32.f32 %v552
  %v617 = vcvt.s32.f32 %v553
  %v618 = vcvt.s32.f32 %v554
  %v619 = vcvt.s32.f32 %v555
  %v620 = vcvt.s32.f32 %v556
  %v621 = vcvt.s32.f32 %v557
  %v622 = vcvt.s32.f32 %v558
  %v623 = vcvt.s32.f32 %v559
  %v624 = vcvt.s32.f32 %v560
  %v625 = vcvt.s32.f32 %v561
  %v626 = vcvt.s32.f32 %v562
  %v627 = vcvt.s32.f32 %v563
  %v628 = vcvt.s32.f32 %v564
  %v629 = vcvt.s32.f32 %v565
  %v630 = vcvt.s32.f32 %v566
  %v631 = vcvt.s32.f32 %v567
  %v632 = vcvt.s32.f32 %v568
  %v633 = vcvt.s32.f32 %v569
  %v634 = vcvt.s32.f32 %v570
  %v635 = vcvt.s32.f32 %v571
  %v636 = vcvt.s32.f32 %v572
  %v637 = vcvt.s32.f32 %v573
  %v638 = vcvt.s32.f32 %v574
  %v639 = vcvt.s32.f32 %v575
  %v640 = vcvt.s32.f32 %v576
  %v641 = vcvt.s32.f32 %v577
  %v642 = vcvt.s32.f32 %v578
  %v643 = vcvt.s32.f32 %v579
  %v644 = vcvt.s32.f32 %v580
  %v645 = vcvt.s32.f32 %v581
  %v646 = vcvt.s32.f32 %v582
  %v647 = vcvt.s32.f32 %v583
  %v648 = vcvt.s32.f32 %v584
  %v649 = vcvt.s32.f32 %v585
  %v650 = vcvt.s32.f32 %v586
  %v651 = vcvt.s32.f32 %v587
  %v652 = vcvt.s32.f32 %v588
  %v653 = vcvt.s32.f32 %v589
  %v654 = vcvt.s32.f32 %v590
  %v655 = vcvt.s32.f32 %v591
  %v656 = vcvt.s32.f32 %v592
  %v657 = vcvt.s32.f32 %v593
  %v658 = vcvt.s32.f32 %v594
  %v659 = vcvt.s32.f32 %v595
  %v660 = vcvt.s32.f32 %v596
  %v661 = vcvt.s32.f32 %v597
  %v662 = vcvt.s32.f32 %v598
  %v663 = vcvt.s32.f32 %v599
  %v664 = vcvt.s32.f32 %v600
  %v665 = vcvt.s32.f32 %v601
  %v666 = vcvt.s32.f32 %v602
  %v667 = vcvt.s32.f32 %v603
  %v668 = vcvt.s32.f32 %v604
  %v669 = vcvt.s32.f32 %v605
  %v670 = vsub.f32 %v286, %v606
  %v671 = vsub.f32 %v287, %v607
  %v672 = vsub.f32 %v288, %v608
  %v673 = vsub.f32 %v289, %v609
  %v674 = vsub.f32 %v290, %v610
  %v675 = vsub.f32 %v291, %v611
  %v676 = vsub.f32 %v292, %v612
  %v677 = vsub.f32 %v293, %v613
  %v678 = vsub.f32 %v294, %v614
  %v679 = vsub.f32 %v295, %v615
  %v680 = vsub.f32 %v296, %v616
  %v681 = vsub.f32 %v297, %v617
  %v682 = vsub.f32 %v298, %v618
  %v683 = vsub.f32 %v299, %v619
  %v684 = vsub.f32 %v300, %v620
  %v685 = vsub.f32 %v301, %v621
  %v686 = vsub.f32 %v302, %v622
  %v687 = vsub.f32 %v303, %v623
  %v688 = vsub.f32 %v304, %v624
  %v689 = vsub.f32 %v305, %v625
  %v690 = vsub.f32 %v306, %v626
  %v691 = vsub.f32 %v307, %v627
  %v692 = vsub.f32 %v308, %v628
  %v693 = vsub.f32 %v309, %v629
  %v694 = vsub.f32 %v310, %v630
  %v695 = vsub.f32 %v311, %v631
  %v696 = vsub.f32 %v312, %v632
  %v697 = vsub.f32 %v313, %v633
  %v698 = vsub.f32 %v314, %v634
  %v699 = vsub.f32 %v315, %v635
  %v700 = vsub.f32 %v316, %v636
  %v701 = vsub.f32 %v317, %v637
  %v702 = vsub.f32 %v318, %v638
  %v703 = vsub.f32 %v319, %v639
  %v704 = vsub.f32 %v320, %v640
  %v705 = vsub.f32 %v321, %v641
  %v706 = vsub.f32 %v322, %v642
  %v707 = vsub.f32 %v323, %v643
  %v708 = vsub.f32 %v324, %v644
  %v709 = vsub.f32 %v325, %v645
  %v710 = vsub.f32 %v326, %v646
  %v711 = vsub.f32 %v327, %v647
  %v712 = vsub.f32 %v328, %v648
  %v713 = vsub.f32 %v329, %v649
  %v714 = vsub.f32 %v330, %v650
  %v715 = vsub.f32 %v331, %v651
  %v716 = vsub.f32 %v332, %v652
  %v717 = vsub.f32 %v333, %v653
  %v718 = vsub.f32 %v334, %v654
  %v719 = vsub.f32 %v335, %v655
  %v720 = vsub.f32 %v336, %v656
  %v721 = vsub.f32 %v337, %v657
  %v722 = vsub.f32 %v338, %v658
  %v723 = vsub.f32 %v339, %v659
  %v724 = vsub.f32 %v340, %v660
  %v725 = vsub.f32 %v341, %v661
  %v726 = vsub.f32 %v342, %v662
  %v727 = vsub.f32 %v343, %v663
  %v728 = vsub.f32 %v344, %v664
  %v729 = vsub.f32 %v345, %v665
  %v730 = vsub.f32 %v346, %v666
  %v731 = vsub.f32 %v347, %v667
  %v732 = vsub.f32 %v348, %v668
  %v733 = vsub.f32 %v349, %v669
  %v734 = vld [vmem:[%s2] sm:$0xff]
  %v735 = vld [vmem:[%s2 + $0x8] sm:$0xff]
  %v736 = vld [vmem:[%s2 + $0x10] sm:$0xff]
  %v737 = vld [vmem:[%s2 + $0x18] sm:$0xff]
  %v738 = vld [vmem:[%s2 + $0x20] sm:$0xff]
  %v739 = vld [vmem:[%s2 + $0x28] sm:$0xff]
  %v740 = vld [vmem:[%s2 + $0x30] sm:$0xff]
  %v741 = vld [vmem:[%s2 + $0x38] sm:$0xff]
  %v742 = vld [vmem:[%s2 + $0x40] sm:$0xff]
  %v743 = vld [vmem:[%s2 + $0x48] sm:$0xff]
  %v744 = vld [vmem:[%s2 + $0x50] sm:$0xff]
  %v745 = vld [vmem:[%s2 + $0x58] sm:$0xff]
  %v746 = vld [vmem:[%s2 + $0x60] sm:$0xff]
  %v747 = vld [vmem:[%s2 + $0x68] sm:$0xff]
  %v748 = vld [vmem:[%s2 + $0x70] sm:$0xff]
  %v749 = vld [vmem:[%s2 + $0x78] sm:$0xff]
  %v750 = vld [vmem:[%s2 + $0x80] sm:$0xff]
  %v751 = vld [vmem:[%s2 + $0x88] sm:$0xff]
  %v752 = vld [vmem:[%s2 + $0x90] sm:$0xff]
  %v753 = vld [vmem:[%s2 + $0x98] sm:$0xff]
  %vm754 = vcmask 261120
  %v756 = vsel %vm754, %v671, 0
  %v759 = vsel %vm754, %v673, 0
  %v762 = vsel %vm754, %v675, 0
  %v765 = vsel %vm754, %v677, 0
  %v768 = vsel %vm754, %v679, 0
  %v771 = vsel %vm754, %v681, 0
  %v774 = vsel %vm754, %v683, 0
  %v777 = vsel %vm754, %v685, 0
  %v780 = vsel %vm754, %v687, 0
  %v783 = vsel %vm754, %v689, 0
  %v786 = vsel %vm754, %v691, 0
  %v789 = vsel %vm754, %v693, 0
  %v792 = vsel %vm754, %v695, 0
  %v795 = vsel %vm754, %v697, 0
  %v798 = vsel %vm754, %v699, 0
  %v801 = vsel %vm754, %v701, 0
  %v804 = vsel %vm754, %v703, 0
  %v807 = vsel %vm754, %v705, 0
  %v810 = vsel %vm754, %v707, 0
  %v813 = vsel %vm754, %v709, 0
  %v816 = vsel %vm754, %v711, 0
  %v819 = vsel %vm754, %v713, 0
  %v822 = vsel %vm754, %v715, 0
  %v825 = vsel %vm754, %v717, 0
  %v828 = vsel %vm754, %v719, 0
  %v831 = vsel %vm754, %v721, 0
  %v834 = vsel %vm754, %v723, 0
  %v837 = vsel %vm754, %v725, 0
  %v840 = vsel %vm754, %v727, 0
  %v843 = vsel %vm754, %v729, 0
  %v846 = vsel %vm754, %v731, 0
  %v849 = vsel %vm754, %v733, 0
  %851 = vmatprep.subr.mxu0 0.0
  %852 = vmatpush1.msra.mxu0 %v749
  %853 = vmatprep.subr.mxu0 0.0
  %854 = vmatpush1.msra.mxu0 %v748
  %855 = vmatprep.subr.mxu0 0.0
  %856 = vmatpush1.msra.mxu0 %v747
  %857 = vmatprep.subr.mxu0 0.0
  %858 = vmatpush1.msra.mxu0 %v746
  %859 = vmatprep.subr.mxu0 0.0
  %860 = vmatpush1.msra.mxu0 %v745
  %861 = vmatprep.subr.mxu0 0.0
  %862 = vmatpush1.msra.mxu0 %v744
  %863 = vmatprep.subr.mxu0 0.0
  %864 = vmatpush1.msra.mxu0 %v743
  %865 = vmatprep.subr.mxu0 0.0
  %866 = vmatpush1.msra.mxu0 %v742
  %867 = vmatprep.subr.mxu0 0.0
  %868 = vmatpush1.msra.mxu0 %v741
  %869 = vmatprep.subr.mxu0 0.0
  %870 = vmatpush1.msra.mxu0 %v740
  %871 = vmatprep.subr.mxu0 0.0
  %872 = vmatpush1.msra.mxu0 %v739
  %873 = vmatprep.subr.mxu0 0.0
  %874 = vmatpush1.msra.mxu0 %v738
  %875 = vmatprep.subr.mxu0 0.0
  %876 = vmatpush1.msra.mxu0 %v737
  %877 = vmatprep.subr.mxu0 0.0
  %878 = vmatpush1.msra.mxu0 %v736
  %879 = vmatprep.subr.mxu0 0.0
  %880 = vmatpush1.msra.mxu0 %v735
  %881 = vmatprep.subr.mxu0 0.0
  %882 = vmatpush1.msra.mxu0 %v734
  %883 = vmatprep.subr.mxu0 0.0
  %884 = vmatpush2.msra.mxu0 0.0
  %885 = vmatprep.subr.mxu0 0.0
  %886 = vmatpush2.msra.mxu0 0.0
  %887 = vmatprep.subr.mxu0 0.0
  %888 = vmatpush2.msra.mxu0 0.0
  %889 = vmatprep.subr.mxu0 0.0
  %890 = vmatpush2.msra.mxu0 0.0
  %891 = vmatprep.subr.mxu0 0.0
  %892 = vmatpush2.msra.mxu0 0.0
  %893 = vmatprep.subr.mxu0 0.0
  %894 = vmatpush2.msra.mxu0 0.0
  %895 = vmatprep.subr.mxu0 0.0
  %896 = vmatpush2.msra.mxu0 0.0
  %897 = vmatprep.subr.mxu0 0.0
  %898 = vmatpush2.msra.mxu0 0.0
  %899 = vmatprep.subr.mxu0 0.0
  %900 = vmatpush2.msra.mxu0 0.0
  %901 = vmatprep.subr.mxu0 0.0
  %902 = vmatpush2.msra.mxu0 0.0
  %903 = vmatprep.subr.mxu0 0.0
  %904 = vmatpush2.msra.mxu0 0.0
  %905 = vmatprep.subr.mxu0 0.0
  %906 = vmatpush2.msra.mxu0 0.0
  %907 = vmatprep.subr.mxu0 0.0
  %908 = vmatpush2.msra.mxu0 %v753
  %909 = vmatprep.subr.mxu0 0.0
  %910 = vmatpush2.msra.mxu0 %v752
  %911 = vmatprep.subr.mxu0 0.0
  %912 = vmatpush2.msra.mxu0 %v751
  %913 = vmatprep.subr.mxu0 0.0
  %914 = vmatpush2.msra.mxu0 %v750
  %915 = vmatprep.mubr.f32.mxu0 %v756
  %916 = vmatmul.mubr.f32.gmra.mxu0 %v670
  %v917 = vpop.f32.mrf.mxu0
  %v918 = vadd.f32 0.0, %v917
  %v919 = vpop.f32.mrf.mxu0
  %920 = vmatprep.mubr.f32.mxu0 %v759
  %921 = vmatmul.mubr.f32.gmra.mxu0 %v672
  %v922 = vpop.f32.mrf.mxu0
  %v923 = vadd.f32 0.0, %v922
  %v924 = vpop.f32.mrf.mxu0
  %925 = vmatprep.mubr.f32.mxu0 %v762
  %926 = vmatmul.mubr.f32.gmra.mxu0 %v674
  %v927 = vpop.f32.mrf.mxu0
  %v928 = vadd.f32 0.0, %v927
  %v929 = vpop.f32.mrf.mxu0
  %930 = vmatprep.mubr.f32.mxu0 %v765
  %931 = vmatmul.mubr.f32.gmra.mxu0 %v676
  %v932 = vpop.f32.mrf.mxu0
  %v933 = vadd.f32 0.0, %v932
  %v934 = vpop.f32.mrf.mxu0
  %935 = vmatprep.mubr.f32.mxu0 %v768
  %936 = vmatmul.mubr.f32.gmra.mxu0 %v678
  %v937 = vpop.f32.mrf.mxu0
  %v938 = vadd.f32 0.0, %v937
  %v939 = vpop.f32.mrf.mxu0
  %940 = vmatprep.mubr.f32.mxu0 %v771
  %941 = vmatmul.mubr.f32.gmra.mxu0 %v680
  %v942 = vpop.f32.mrf.mxu0
  %v943 = vadd.f32 0.0, %v942
  %v944 = vpop.f32.mrf.mxu0
  %945 = vmatprep.mubr.f32.mxu0 %v774
  %946 = vmatmul.mubr.f32.gmra.mxu0 %v682
  %v947 = vpop.f32.mrf.mxu0
  %v948 = vadd.f32 0.0, %v947
  %v949 = vpop.f32.mrf.mxu0
  %950 = vmatprep.mubr.f32.mxu0 %v777
  %951 = vmatmul.mubr.f32.gmra.mxu0 %v684
  %v952 = vpop.f32.mrf.mxu0
  %v953 = vadd.f32 0.0, %v952
  %v954 = vpop.f32.mrf.mxu0
  %955 = vmatprep.mubr.f32.mxu0 %v780
  %956 = vmatmul.mubr.f32.gmra.mxu0 %v686
  %v957 = vpop.f32.mrf.mxu0
  %v958 = vadd.f32 0.0, %v957
  %v959 = vpop.f32.mrf.mxu0
  %960 = vmatprep.mubr.f32.mxu0 %v783
  %961 = vmatmul.mubr.f32.gmra.mxu0 %v688
  %v962 = vpop.f32.mrf.mxu0
  %v963 = vadd.f32 0.0, %v962
  %v964 = vpop.f32.mrf.mxu0
  %965 = vmatprep.mubr.f32.mxu0 %v786
  %966 = vmatmul.mubr.f32.gmra.mxu0 %v690
  %v967 = vpop.f32.mrf.mxu0
  %v968 = vadd.f32 0.0, %v967
  %v969 = vpop.f32.mrf.mxu0
  %970 = vmatprep.mubr.f32.mxu0 %v789
  %971 = vmatmul.mubr.f32.gmra.mxu0 %v692
  %v972 = vpop.f32.mrf.mxu0
  %v973 = vadd.f32 0.0, %v972
  %v974 = vpop.f32.mrf.mxu0
  %975 = vmatprep.mubr.f32.mxu0 %v792
  %976 = vmatmul.mubr.f32.gmra.mxu0 %v694
  %v977 = vpop.f32.mrf.mxu0
  %v978 = vadd.f32 0.0, %v977
  %v979 = vpop.f32.mrf.mxu0
  %980 = vmatprep.mubr.f32.mxu0 %v795
  %981 = vmatmul.mubr.f32.gmra.mxu0 %v696
  %v982 = vpop.f32.mrf.mxu0
  %v983 = vadd.f32 0.0, %v982
  %v984 = vpop.f32.mrf.mxu0
  %985 = vmatprep.mubr.f32.mxu0 %v798
  %986 = vmatmul.mubr.f32.gmra.mxu0 %v698
  %v987 = vpop.f32.mrf.mxu0
  %v988 = vadd.f32 0.0, %v987
  %v989 = vpop.f32.mrf.mxu0
  %990 = vmatprep.mubr.f32.mxu0 %v801
  %991 = vmatmul.mubr.f32.gmra.mxu0 %v700
  %v992 = vpop.f32.mrf.mxu0
  %v993 = vadd.f32 0.0, %v992
  %v994 = vpop.f32.mrf.mxu0
  %995 = vmatprep.mubr.f32.mxu0 %v804
  %996 = vmatmul.mubr.f32.gmra.mxu0 %v702
  %v997 = vpop.f32.mrf.mxu0
  %v998 = vadd.f32 0.0, %v997
  %v999 = vpop.f32.mrf.mxu0
  %1000 = vmatprep.mubr.f32.mxu0 %v807
  %1001 = vmatmul.mubr.f32.gmra.mxu0 %v704
  %v1002 = vpop.f32.mrf.mxu0
  %v1003 = vadd.f32 0.0, %v1002
  %v1004 = vpop.f32.mrf.mxu0
  %1005 = vmatprep.mubr.f32.mxu0 %v810
  %1006 = vmatmul.mubr.f32.gmra.mxu0 %v706
  %v1007 = vpop.f32.mrf.mxu0
  %v1008 = vadd.f32 0.0, %v1007
  %v1009 = vpop.f32.mrf.mxu0
  %1010 = vmatprep.mubr.f32.mxu0 %v813
  %1011 = vmatmul.mubr.f32.gmra.mxu0 %v708
  %v1012 = vpop.f32.mrf.mxu0
  %v1013 = vadd.f32 0.0, %v1012
  %v1014 = vpop.f32.mrf.mxu0
  %1015 = vmatprep.mubr.f32.mxu0 %v816
  %1016 = vmatmul.mubr.f32.gmra.mxu0 %v710
  %v1017 = vpop.f32.mrf.mxu0
  %v1018 = vadd.f32 0.0, %v1017
  %v1019 = vpop.f32.mrf.mxu0
  %1020 = vmatprep.mubr.f32.mxu0 %v819
  %1021 = vmatmul.mubr.f32.gmra.mxu0 %v712
  %v1022 = vpop.f32.mrf.mxu0
  %v1023 = vadd.f32 0.0, %v1022
  %v1024 = vpop.f32.mrf.mxu0
  %1025 = vmatprep.mubr.f32.mxu0 %v822
  %1026 = vmatmul.mubr.f32.gmra.mxu0 %v714
  %v1027 = vpop.f32.mrf.mxu0
  %v1028 = vadd.f32 0.0, %v1027
  %v1029 = vpop.f32.mrf.mxu0
  %1030 = vmatprep.mubr.f32.mxu0 %v825
  %1031 = vmatmul.mubr.f32.gmra.mxu0 %v716
  %v1032 = vpop.f32.mrf.mxu0
  %v1033 = vadd.f32 0.0, %v1032
  %v1034 = vpop.f32.mrf.mxu0
  %1035 = vmatprep.mubr.f32.mxu0 %v828
  %1036 = vmatmul.mubr.f32.gmra.mxu0 %v718
  %v1037 = vpop.f32.mrf.mxu0
  %v1038 = vadd.f32 0.0, %v1037
  %v1039 = vpop.f32.mrf.mxu0
  %1040 = vmatprep.mubr.f32.mxu0 %v831
  %1041 = vmatmul.mubr.f32.gmra.mxu0 %v720
  %v1042 = vpop.f32.mrf.mxu0
  %v1043 = vadd.f32 0.0, %v1042
  %v1044 = vpop.f32.mrf.mxu0
  %1045 = vmatprep.mubr.f32.mxu0 %v834
  %1046 = vmatmul.mubr.f32.gmra.mxu0 %v722
  %v1047 = vpop.f32.mrf.mxu0
  %v1048 = vadd.f32 0.0, %v1047
  %v1049 = vpop.f32.mrf.mxu0
  %1050 = vmatprep.mubr.f32.mxu0 %v837
  %1051 = vmatmul.mubr.f32.gmra.mxu0 %v724
  %v1052 = vpop.f32.mrf.mxu0
  %v1053 = vadd.f32 0.0, %v1052
  %v1054 = vpop.f32.mrf.mxu0
  %1055 = vmatprep.mubr.f32.mxu0 %v840
  %1056 = vmatmul.mubr.f32.gmra.mxu0 %v726
  %v1057 = vpop.f32.mrf.mxu0
  %v1058 = vadd.f32 0.0, %v1057
  %v1059 = vpop.f32.mrf.mxu0
  %1060 = vmatprep.mubr.f32.mxu0 %v843
  %1061 = vmatmul.mubr.f32.gmra.mxu0 %v728
  %v1062 = vpop.f32.mrf.mxu0
  %v1063 = vadd.f32 0.0, %v1062
  %v1064 = vpop.f32.mrf.mxu0
  %1065 = vmatprep.mubr.f32.mxu0 %v846
  %1066 = vmatmul.mubr.f32.gmra.mxu0 %v730
  %v1067 = vpop.f32.mrf.mxu0
  %v1068 = vadd.f32 0.0, %v1067
  %v1069 = vpop.f32.mrf.mxu0
  %1070 = vmatprep.mubr.f32.mxu0 %v849
  %1071 = vmatmul.mubr.f32.gmra.mxu0 %v732
  %v1072 = vpop.f32.mrf.mxu0
  %v1073 = vadd.f32 0.0, %v1072
  %v1074 = vpop.f32.mrf.mxu0
  %1075 = vdwg.mxu0
  %v1076 = vld [vmem:[%s3] sm:$0xff]
  %v1077 = vld [vmem:[%s3 + $0x8] sm:$0xff]
  %v1078 = vld [vmem:[%s3 + $0x10] sm:$0xff]
  %v1079 = vld [vmem:[%s3 + $0x18] sm:$0xff]
  %v1080 = vld [vmem:[%s3 + $0x20] sm:$0x7]
  %v1081 = vlaneseq
  %v1082 = vshrl.u32 %v1081, 7
  %v1083 = vsub.s32 0, %v1082
  %v1084 = vrot.slane %v26, %v1083
  %vm1085 = vcmask 285696
  %v1087 = vsel %vm1085, %v918, 0
  %v1090 = vsel %vm1085, %v923, 0
  %v1093 = vsel %vm1085, %v928, 0
  %v1096 = vsel %vm1085, %v933, 0
  %v1099 = vsel %vm1085, %v938, 0
  %v1102 = vsel %vm1085, %v943, 0
  %v1105 = vsel %vm1085, %v948, 0
  %v1108 = vsel %vm1085, %v953, 0
  %v1111 = vsel %vm1085, %v958, 0
  %v1114 = vsel %vm1085, %v963, 0
  %v1117 = vsel %vm1085, %v968, 0
  %v1120 = vsel %vm1085, %v973, 0
  %v1123 = vsel %vm1085, %v978, 0
  %v1126 = vsel %vm1085, %v983, 0
  %v1129 = vsel %vm1085, %v988, 0
  %v1132 = vsel %vm1085, %v993, 0
  %v1135 = vsel %vm1085, %v998, 0
  %v1138 = vsel %vm1085, %v1003, 0
  %v1141 = vsel %vm1085, %v1008, 0
  %v1144 = vsel %vm1085, %v1013, 0
  %v1147 = vsel %vm1085, %v1018, 0
  %v1150 = vsel %vm1085, %v1023, 0
  %v1153 = vsel %vm1085, %v1028, 0
  %v1156 = vsel %vm1085, %v1033, 0
  %v1159 = vsel %vm1085, %v1038, 0
  %v1162 = vsel %vm1085, %v1043, 0
  %v1165 = vsel %vm1085, %v1048, 0
  %v1168 = vsel %vm1085, %v1053, 0
  %v1171 = vsel %vm1085, %v1058, 0
  %v1174 = vsel %vm1085, %v1063, 0
  %v1177 = vsel %vm1085, %v1068, 0
  %v1180 = vsel %vm1085, %v1073, 0
  %vm1182 = vcmask 1042432
  %v1184 = vsel %vm1182, %v1080, 0
  %1186 = vmatprep.subr.mxu0 0.0
  %1187 = vmatpush1.msra.mxu0 0.0
  %1188 = vmatprep.subr.mxu0 0.0
  %1189 = vmatpush1.msra.mxu0 0.0
  %1190 = vmatprep.subr.mxu0 0.0
  %1191 = vmatpush1.msra.mxu0 0.0
  %1192 = vmatprep.subr.mxu0 0.0
  %1193 = vmatpush1.msra.mxu0 0.0
  %1194 = vmatprep.subr.mxu0 0.0
  %1195 = vmatpush1.msra.mxu0 0.0
  %1196 = vmatprep.subr.mxu0 0.0
  %1197 = vmatpush1.msra.mxu0 0.0
  %1198 = vmatprep.subr.mxu0 0.0
  %1199 = vmatpush1.msra.mxu0 0.0
  %1200 = vmatprep.subr.mxu0 0.0
  %1201 = vmatpush1.msra.mxu0 0.0
  %1202 = vmatprep.subr.mxu0 0.0
  %1203 = vmatpush1.msra.mxu0 0.0
  %1204 = vmatprep.subr.mxu0 0.0
  %1205 = vmatpush1.msra.mxu0 0.0
  %1206 = vmatprep.subr.mxu0 0.0
  %1207 = vmatpush1.msra.mxu0 0.0
  %1208 = vmatprep.subr.mxu0 0.0
  %1209 = vmatpush1.msra.mxu0 %v1184
  %1210 = vmatprep.subr.mxu0 0.0
  %1211 = vmatpush1.msra.mxu0 %v1079
  %1212 = vmatprep.subr.mxu0 0.0
  %1213 = vmatpush1.msra.mxu0 %v1078
  %1214 = vmatprep.subr.mxu0 0.0
  %1215 = vmatpush1.msra.mxu0 %v1077
  %1216 = vmatprep.subr.mxu0 0.0
  %1217 = vmatpush1.msra.mxu0 %v1076
  %1218 = vmatprep.subr.mxu0 0.0
  %1219 = vmatpush2.msra.mxu0 0.0
  %1220 = vmatprep.subr.mxu0 0.0
  %1221 = vmatpush2.msra.mxu0 0.0
  %1222 = vmatprep.subr.mxu0 0.0
  %1223 = vmatpush2.msra.mxu0 0.0
  %1224 = vmatprep.subr.mxu0 0.0
  %1225 = vmatpush2.msra.mxu0 0.0
  %1226 = vmatprep.subr.mxu0 0.0
  %1227 = vmatpush2.msra.mxu0 0.0
  %1228 = vmatprep.subr.mxu0 0.0
  %1229 = vmatpush2.msra.mxu0 0.0
  %1230 = vmatprep.subr.mxu0 0.0
  %1231 = vmatpush2.msra.mxu0 0.0
  %1232 = vmatprep.subr.mxu0 0.0
  %1233 = vmatpush2.msra.mxu0 0.0
  %1234 = vmatprep.subr.mxu0 0.0
  %1235 = vmatpush2.msra.mxu0 0.0
  %1236 = vmatprep.subr.mxu0 0.0
  %1237 = vmatpush2.msra.mxu0 0.0
  %1238 = vmatprep.subr.mxu0 0.0
  %1239 = vmatpush2.msra.mxu0 0.0
  %1240 = vmatprep.subr.mxu0 0.0
  %1241 = vmatpush2.msra.mxu0 0.0
  %1242 = vmatprep.subr.mxu0 0.0
  %1243 = vmatpush2.msra.mxu0 0.0
  %1244 = vmatprep.subr.mxu0 0.0
  %1245 = vmatpush2.msra.mxu0 0.0
  %1246 = vmatprep.subr.mxu0 0.0
  %1247 = vmatpush2.msra.mxu0 0.0
  %1248 = vmatprep.subr.mxu0 0.0
  %1249 = vmatpush2.msra.mxu0 0.0
  %1250 = vmatprep.mubr.f32.mxu0 0.0
  %1251 = vmatmul.mubr.f32.gmra.mxu0 %v1087
  %v1252 = vpop.f32.mrf.mxu0
  %v1253 = vadd.f32 %v1084, %v1252
  %v1254 = vpop.f32.mrf.mxu0
  %1255 = vmatprep.mubr.f32.mxu0 0.0
  %1256 = vmatmul.mubr.f32.gmra.mxu0 %v1090
  %v1257 = vpop.f32.mrf.mxu0
  %v1258 = vadd.f32 %v1084, %v1257
  %v1259 = vpop.f32.mrf.mxu0
  %1260 = vmatprep.mubr.f32.mxu0 0.0
  %1261 = vmatmul.mubr.f32.gmra.mxu0 %v1093
  %v1262 = vpop.f32.mrf.mxu0
  %v1263 = vadd.f32 %v1084, %v1262
  %v1264 = vpop.f32.mrf.mxu0
  %1265 = vmatprep.mubr.f32.mxu0 0.0
  %1266 = vmatmul.mubr.f32.gmra.mxu0 %v1096
  %v1267 = vpop.f32.mrf.mxu0
  %v1268 = vadd.f32 %v1084, %v1267
  %v1269 = vpop.f32.mrf.mxu0
  %1270 = vmatprep.mubr.f32.mxu0 0.0
  %1271 = vmatmul.mubr.f32.gmra.mxu0 %v1099
  %v1272 = vpop.f32.mrf.mxu0
  %v1273 = vadd.f32 %v1084, %v1272
  %v1274 = vpop.f32.mrf.mxu0
  %1275 = vmatprep.mubr.f32.mxu0 0.0
  %1276 = vmatmul.mubr.f32.gmra.mxu0 %v1102
  %v1277 = vpop.f32.mrf.mxu0
  %v1278 = vadd.f32 %v1084, %v1277
  %v1279 = vpop.f32.mrf.mxu0
  %1280 = vmatprep.mubr.f32.mxu0 0.0
  %1281 = vmatmul.mubr.f32.gmra.mxu0 %v1105
  %v1282 = vpop.f32.mrf.mxu0
  %v1283 = vadd.f32 %v1084, %v1282
  %v1284 = vpop.f32.mrf.mxu0
  %1285 = vmatprep.mubr.f32.mxu0 0.0
  %1286 = vmatmul.mubr.f32.gmra.mxu0 %v1108
  %v1287 = vpop.f32.mrf.mxu0
  %v1288 = vadd.f32 %v1084, %v1287
  %v1289 = vpop.f32.mrf.mxu0
  %1290 = vmatprep.mubr.f32.mxu0 0.0
  %1291 = vmatmul.mubr.f32.gmra.mxu0 %v1111
  %v1292 = vpop.f32.mrf.mxu0
  %v1293 = vadd.f32 %v1084, %v1292
  %v1294 = vpop.f32.mrf.mxu0
  %1295 = vmatprep.mubr.f32.mxu0 0.0
  %1296 = vmatmul.mubr.f32.gmra.mxu0 %v1114
  %v1297 = vpop.f32.mrf.mxu0
  %v1298 = vadd.f32 %v1084, %v1297
  %v1299 = vpop.f32.mrf.mxu0
  %1300 = vmatprep.mubr.f32.mxu0 0.0
  %1301 = vmatmul.mubr.f32.gmra.mxu0 %v1117
  %v1302 = vpop.f32.mrf.mxu0
  %v1303 = vadd.f32 %v1084, %v1302
  %v1304 = vpop.f32.mrf.mxu0
  %1305 = vmatprep.mubr.f32.mxu0 0.0
  %1306 = vmatmul.mubr.f32.gmra.mxu0 %v1120
  %v1307 = vpop.f32.mrf.mxu0
  %v1308 = vadd.f32 %v1084, %v1307
  %v1309 = vpop.f32.mrf.mxu0
  %1310 = vmatprep.mubr.f32.mxu0 0.0
  %1311 = vmatmul.mubr.f32.gmra.mxu0 %v1123
  %v1312 = vpop.f32.mrf.mxu0
  %v1313 = vadd.f32 %v1084, %v1312
  %v1314 = vpop.f32.mrf.mxu0
  %1315 = vmatprep.mubr.f32.mxu0 0.0
  %1316 = vmatmul.mubr.f32.gmra.mxu0 %v1126
  %v1317 = vpop.f32.mrf.mxu0
  %v1318 = vadd.f32 %v1084, %v1317
  %v1319 = vpop.f32.mrf.mxu0
  %1320 = vmatprep.mubr.f32.mxu0 0.0
  %1321 = vmatmul.mubr.f32.gmra.mxu0 %v1129
  %v1322 = vpop.f32.mrf.mxu0
  %v1323 = vadd.f32 %v1084, %v1322
  %v1324 = vpop.f32.mrf.mxu0
  %1325 = vmatprep.mubr.f32.mxu0 0.0
  %1326 = vmatmul.mubr.f32.gmra.mxu0 %v1132
  %v1327 = vpop.f32.mrf.mxu0
  %v1328 = vadd.f32 %v1084, %v1327
  %v1329 = vpop.f32.mrf.mxu0
  %1330 = vmatprep.mubr.f32.mxu0 0.0
  %1331 = vmatmul.mubr.f32.gmra.mxu0 %v1135
  %v1332 = vpop.f32.mrf.mxu0
  %v1333 = vadd.f32 %v1084, %v1332
  %v1334 = vpop.f32.mrf.mxu0
  %1335 = vmatprep.mubr.f32.mxu0 0.0
  %1336 = vmatmul.mubr.f32.gmra.mxu0 %v1138
  %v1337 = vpop.f32.mrf.mxu0
  %v1338 = vadd.f32 %v1084, %v1337
  %v1339 = vpop.f32.mrf.mxu0
  %1340 = vmatprep.mubr.f32.mxu0 0.0
  %1341 = vmatmul.mubr.f32.gmra.mxu0 %v1141
  %v1342 = vpop.f32.mrf.mxu0
  %v1343 = vadd.f32 %v1084, %v1342
  %v1344 = vpop.f32.mrf.mxu0
  %1345 = vmatprep.mubr.f32.mxu0 0.0
  %1346 = vmatmul.mubr.f32.gmra.mxu0 %v1144
  %v1347 = vpop.f32.mrf.mxu0
  %v1348 = vadd.f32 %v1084, %v1347
  %v1349 = vpop.f32.mrf.mxu0
  %1350 = vmatprep.mubr.f32.mxu0 0.0
  %1351 = vmatmul.mubr.f32.gmra.mxu0 %v1147
  %v1352 = vpop.f32.mrf.mxu0
  %v1353 = vadd.f32 %v1084, %v1352
  %v1354 = vpop.f32.mrf.mxu0
  %1355 = vmatprep.mubr.f32.mxu0 0.0
  %1356 = vmatmul.mubr.f32.gmra.mxu0 %v1150
  %v1357 = vpop.f32.mrf.mxu0
  %v1358 = vadd.f32 %v1084, %v1357
  %v1359 = vpop.f32.mrf.mxu0
  %1360 = vmatprep.mubr.f32.mxu0 0.0
  %1361 = vmatmul.mubr.f32.gmra.mxu0 %v1153
  %v1362 = vpop.f32.mrf.mxu0
  %v1363 = vadd.f32 %v1084, %v1362
  %v1364 = vpop.f32.mrf.mxu0
  %1365 = vmatprep.mubr.f32.mxu0 0.0
  %1366 = vmatmul.mubr.f32.gmra.mxu0 %v1156
  %v1367 = vpop.f32.mrf.mxu0
  %v1368 = vadd.f32 %v1084, %v1367
  %v1369 = vpop.f32.mrf.mxu0
  %1370 = vmatprep.mubr.f32.mxu0 0.0
  %1371 = vmatmul.mubr.f32.gmra.mxu0 %v1159
  %v1372 = vpop.f32.mrf.mxu0
  %v1373 = vadd.f32 %v1084, %v1372
  %v1374 = vpop.f32.mrf.mxu0
  %1375 = vmatprep.mubr.f32.mxu0 0.0
  %1376 = vmatmul.mubr.f32.gmra.mxu0 %v1162
  %v1377 = vpop.f32.mrf.mxu0
  %v1378 = vadd.f32 %v1084, %v1377
  %v1379 = vpop.f32.mrf.mxu0
  %1380 = vmatprep.mubr.f32.mxu0 0.0
  %1381 = vmatmul.mubr.f32.gmra.mxu0 %v1165
  %v1382 = vpop.f32.mrf.mxu0
  %v1383 = vadd.f32 %v1084, %v1382
  %v1384 = vpop.f32.mrf.mxu0
  %1385 = vmatprep.mubr.f32.mxu0 0.0
  %1386 = vmatmul.mubr.f32.gmra.mxu0 %v1168
  %v1387 = vpop.f32.mrf.mxu0
  %v1388 = vadd.f32 %v1084, %v1387
  %v1389 = vpop.f32.mrf.mxu0
  %1390 = vmatprep.mubr.f32.mxu0 0.0
  %1391 = vmatmul.mubr.f32.gmra.mxu0 %v1171
  %v1392 = vpop.f32.mrf.mxu0
  %v1393 = vadd.f32 %v1084, %v1392
  %v1394 = vpop.f32.mrf.mxu0
  %1395 = vmatprep.mubr.f32.mxu0 0.0
  %1396 = vmatmul.mubr.f32.gmra.mxu0 %v1174
  %v1397 = vpop.f32.mrf.mxu0
  %v1398 = vadd.f32 %v1084, %v1397
  %v1399 = vpop.f32.mrf.mxu0
  %1400 = vmatprep.mubr.f32.mxu0 0.0
  %1401 = vmatmul.mubr.f32.gmra.mxu0 %v1177
  %v1402 = vpop.f32.mrf.mxu0
  %v1403 = vadd.f32 %v1084, %v1402
  %v1404 = vpop.f32.mrf.mxu0
  %1405 = vmatprep.mubr.f32.mxu0 0.0
  %1406 = vmatmul.mubr.f32.gmra.mxu0 %v1180
  %v1407 = vpop.f32.mrf.mxu0
  %v1408 = vadd.f32 %v1084, %v1407
  %v1409 = vpop.f32.mrf.mxu0
  %1410 = vdwg.mxu0
  %v1411 = vmax.f32 %v1253, 0.0
  %v1412 = vmax.f32 %v1258, 0.0
  %v1413 = vmax.f32 %v1263, 0.0
  %v1414 = vmax.f32 %v1268, 0.0
  %v1415 = vmax.f32 %v1273, 0.0
  %v1416 = vmax.f32 %v1278, 0.0
  %v1417 = vmax.f32 %v1283, 0.0
  %v1418 = vmax.f32 %v1288, 0.0
  %v1419 = vmax.f32 %v1293, 0.0
  %v1420 = vmax.f32 %v1298, 0.0
  %v1421 = vmax.f32 %v1303, 0.0
  %v1422 = vmax.f32 %v1308, 0.0
  %v1423 = vmax.f32 %v1313, 0.0
  %v1424 = vmax.f32 %v1318, 0.0
  %v1425 = vmax.f32 %v1323, 0.0
  %v1426 = vmax.f32 %v1328, 0.0
  %v1427 = vmax.f32 %v1333, 0.0
  %v1428 = vmax.f32 %v1338, 0.0
  %v1429 = vmax.f32 %v1343, 0.0
  %v1430 = vmax.f32 %v1348, 0.0
  %v1431 = vmax.f32 %v1353, 0.0
  %v1432 = vmax.f32 %v1358, 0.0
  %v1433 = vmax.f32 %v1363, 0.0
  %v1434 = vmax.f32 %v1368, 0.0
  %v1435 = vmax.f32 %v1373, 0.0
  %v1436 = vmax.f32 %v1378, 0.0
  %v1437 = vmax.f32 %v1383, 0.0
  %v1438 = vmax.f32 %v1388, 0.0
  %v1439 = vmax.f32 %v1393, 0.0
  %v1440 = vmax.f32 %v1398, 0.0
  %v1441 = vmax.f32 %v1403, 0.0
  %v1442 = vmax.f32 %v1408, 0.0
  %v1443 = vld [vmem:[%s4] sm:$0xff]
  %v1444 = vld [vmem:[%s4 + $0x8] sm:$0xff]
  %v1445 = vld [vmem:[%s4 + $0x10] sm:$0xff]
  %v1446 = vld [vmem:[%s4 + $0x18] sm:$0xff]
  %v1447 = vlaneseq
  %v1448 = vshrl.u32 %v1447, 7
  %v1449 = vsub.s32 1, %v1448
  %v1450 = vrot.slane %v26, %v1449
  %v1452 = vsel %vm754, %v1411, 0
  %v1455 = vsel %vm754, %v1412, 0
  %v1458 = vsel %vm754, %v1413, 0
  %v1461 = vsel %vm754, %v1414, 0
  %v1464 = vsel %vm754, %v1415, 0
  %v1467 = vsel %vm754, %v1416, 0
  %v1470 = vsel %vm754, %v1417, 0
  %v1473 = vsel %vm754, %v1418, 0
  %v1476 = vsel %vm754, %v1419, 0
  %v1479 = vsel %vm754, %v1420, 0
  %v1482 = vsel %vm754, %v1421, 0
  %v1485 = vsel %vm754, %v1422, 0
  %v1488 = vsel %vm754, %v1423, 0
  %v1491 = vsel %vm754, %v1424, 0
  %v1494 = vsel %vm754, %v1425, 0
  %v1497 = vsel %vm754, %v1426, 0
  %v1500 = vsel %vm754, %v1427, 0
  %v1503 = vsel %vm754, %v1428, 0
  %v1506 = vsel %vm754, %v1429, 0
  %v1509 = vsel %vm754, %v1430, 0
  %v1512 = vsel %vm754, %v1431, 0
  %v1515 = vsel %vm754, %v1432, 0
  %v1518 = vsel %vm754, %v1433, 0
  %v1521 = vsel %vm754, %v1434, 0
  %v1524 = vsel %vm754, %v1435, 0
  %v1527 = vsel %vm754, %v1436, 0
  %v1530 = vsel %vm754, %v1437, 0
  %v1533 = vsel %vm754, %v1438, 0
  %v1536 = vsel %vm754, %v1439, 0
  %v1539 = vsel %vm754, %v1440, 0
  %v1542 = vsel %vm754, %v1441, 0
  %v1545 = vsel %vm754, %v1442, 0
  %1547 = vmatprep.subr.mxu0 0.0
  %1548 = vmatpush1.msra.mxu0 0.0
  %1549 = vmatprep.subr.mxu0 0.0
  %1550 = vmatpush1.msra.mxu0 0.0
  %1551 = vmatprep.subr.mxu0 0.0
  %1552 = vmatpush1.msra.mxu0 0.0
  %1553 = vmatprep.subr.mxu0 0.0
  %1554 = vmatpush1.msra.mxu0 0.0
  %1555 = vmatprep.subr.mxu0 0.0
  %1556 = vmatpush1.msra.mxu0 0.0
  %1557 = vmatprep.subr.mxu0 0.0
  %1558 = vmatpush1.msra.mxu0 0.0
  %1559 = vmatprep.subr.mxu0 0.0
  %1560 = vmatpush1.msra.mxu0 0.0
  %1561 = vmatprep.subr.mxu0 0.0
  %1562 = vmatpush1.msra.mxu0 0.0
  %1563 = vmatprep.subr.mxu0 0.0
  %1564 = vmatpush1.msra.mxu0 0.0
  %1565 = vmatprep.subr.mxu0 0.0
  %1566 = vmatpush1.msra.mxu0 0.0
  %1567 = vmatprep.subr.mxu0 0.0
  %1568 = vmatpush1.msra.mxu0 0.0
  %1569 = vmatprep.subr.mxu0 0.0
  %1570 = vmatpush1.msra.mxu0 0.0
  %1571 = vmatprep.subr.mxu0 0.0
  %1572 = vmatpush1.msra.mxu0 %v1446
  %1573 = vmatprep.subr.mxu0 0.0
  %1574 = vmatpush1.msra.mxu0 %v1445
  %1575 = vmatprep.subr.mxu0 0.0
  %1576 = vmatpush1.msra.mxu0 %v1444
  %1577 = vmatprep.subr.mxu0 0.0
  %1578 = vmatpush1.msra.mxu0 %v1443
  %1579 = vmatprep.subr.mxu0 0.0
  %1580 = vmatpush2.msra.mxu0 0.0
  %1581 = vmatprep.subr.mxu0 0.0
  %1582 = vmatpush2.msra.mxu0 0.0
  %1583 = vmatprep.subr.mxu0 0.0
  %1584 = vmatpush2.msra.mxu0 0.0
  %1585 = vmatprep.subr.mxu0 0.0
  %1586 = vmatpush2.msra.mxu0 0.0
  %1587 = vmatprep.subr.mxu0 0.0
  %1588 = vmatpush2.msra.mxu0 0.0
  %1589 = vmatprep.subr.mxu0 0.0
  %1590 = vmatpush2.msra.mxu0 0.0
  %1591 = vmatprep.subr.mxu0 0.0
  %1592 = vmatpush2.msra.mxu0 0.0
  %1593 = vmatprep.subr.mxu0 0.0
  %1594 = vmatpush2.msra.mxu0 0.0
  %1595 = vmatprep.subr.mxu0 0.0
  %1596 = vmatpush2.msra.mxu0 0.0
  %1597 = vmatprep.subr.mxu0 0.0
  %1598 = vmatpush2.msra.mxu0 0.0
  %1599 = vmatprep.subr.mxu0 0.0
  %1600 = vmatpush2.msra.mxu0 0.0
  %1601 = vmatprep.subr.mxu0 0.0
  %1602 = vmatpush2.msra.mxu0 0.0
  %1603 = vmatprep.subr.mxu0 0.0
  %1604 = vmatpush2.msra.mxu0 0.0
  %1605 = vmatprep.subr.mxu0 0.0
  %1606 = vmatpush2.msra.mxu0 0.0
  %1607 = vmatprep.subr.mxu0 0.0
  %1608 = vmatpush2.msra.mxu0 0.0
  %1609 = vmatprep.subr.mxu0 0.0
  %1610 = vmatpush2.msra.mxu0 0.0
  %1611 = vmatprep.mubr.f32.mxu0 0.0
  %1612 = vmatmul.mubr.f32.gmra.mxu0 %v1452
  %v1613 = vpop.f32.mrf.mxu0
  %v1614 = vadd.f32 %v1450, %v1613
  %v1615 = vpop.f32.mrf.mxu0
  %1616 = vmatprep.mubr.f32.mxu0 0.0
  %1617 = vmatmul.mubr.f32.gmra.mxu0 %v1455
  %v1618 = vpop.f32.mrf.mxu0
  %v1619 = vadd.f32 %v1450, %v1618
  %v1620 = vpop.f32.mrf.mxu0
  %1621 = vmatprep.mubr.f32.mxu0 0.0
  %1622 = vmatmul.mubr.f32.gmra.mxu0 %v1458
  %v1623 = vpop.f32.mrf.mxu0
  %v1624 = vadd.f32 %v1450, %v1623
  %v1625 = vpop.f32.mrf.mxu0
  %1626 = vmatprep.mubr.f32.mxu0 0.0
  %1627 = vmatmul.mubr.f32.gmra.mxu0 %v1461
  %v1628 = vpop.f32.mrf.mxu0
  %v1629 = vadd.f32 %v1450, %v1628
  %v1630 = vpop.f32.mrf.mxu0
  %1631 = vmatprep.mubr.f32.mxu0 0.0
  %1632 = vmatmul.mubr.f32.gmra.mxu0 %v1464
  %v1633 = vpop.f32.mrf.mxu0
  %v1634 = vadd.f32 %v1450, %v1633
  %v1635 = vpop.f32.mrf.mxu0
  %1636 = vmatprep.mubr.f32.mxu0 0.0
  %1637 = vmatmul.mubr.f32.gmra.mxu0 %v1467
  %v1638 = vpop.f32.mrf.mxu0
  %v1639 = vadd.f32 %v1450, %v1638
  %v1640 = vpop.f32.mrf.mxu0
  %1641 = vmatprep.mubr.f32.mxu0 0.0
  %1642 = vmatmul.mubr.f32.gmra.mxu0 %v1470
  %v1643 = vpop.f32.mrf.mxu0
  %v1644 = vadd.f32 %v1450, %v1643
  %v1645 = vpop.f32.mrf.mxu0
  %1646 = vmatprep.mubr.f32.mxu0 0.0
  %1647 = vmatmul.mubr.f32.gmra.mxu0 %v1473
  %v1648 = vpop.f32.mrf.mxu0
  %v1649 = vadd.f32 %v1450, %v1648
  %v1650 = vpop.f32.mrf.mxu0
  %1651 = vmatprep.mubr.f32.mxu0 0.0
  %1652 = vmatmul.mubr.f32.gmra.mxu0 %v1476
  %v1653 = vpop.f32.mrf.mxu0
  %v1654 = vadd.f32 %v1450, %v1653
  %v1655 = vpop.f32.mrf.mxu0
  %1656 = vmatprep.mubr.f32.mxu0 0.0
  %1657 = vmatmul.mubr.f32.gmra.mxu0 %v1479
  %v1658 = vpop.f32.mrf.mxu0
  %v1659 = vadd.f32 %v1450, %v1658
  %v1660 = vpop.f32.mrf.mxu0
  %1661 = vmatprep.mubr.f32.mxu0 0.0
  %1662 = vmatmul.mubr.f32.gmra.mxu0 %v1482
  %v1663 = vpop.f32.mrf.mxu0
  %v1664 = vadd.f32 %v1450, %v1663
  %v1665 = vpop.f32.mrf.mxu0
  %1666 = vmatprep.mubr.f32.mxu0 0.0
  %1667 = vmatmul.mubr.f32.gmra.mxu0 %v1485
  %v1668 = vpop.f32.mrf.mxu0
  %v1669 = vadd.f32 %v1450, %v1668
  %v1670 = vpop.f32.mrf.mxu0
  %1671 = vmatprep.mubr.f32.mxu0 0.0
  %1672 = vmatmul.mubr.f32.gmra.mxu0 %v1488
  %v1673 = vpop.f32.mrf.mxu0
  %v1674 = vadd.f32 %v1450, %v1673
  %v1675 = vpop.f32.mrf.mxu0
  %1676 = vmatprep.mubr.f32.mxu0 0.0
  %1677 = vmatmul.mubr.f32.gmra.mxu0 %v1491
  %v1678 = vpop.f32.mrf.mxu0
  %v1679 = vadd.f32 %v1450, %v1678
  %v1680 = vpop.f32.mrf.mxu0
  %1681 = vmatprep.mubr.f32.mxu0 0.0
  %1682 = vmatmul.mubr.f32.gmra.mxu0 %v1494
  %v1683 = vpop.f32.mrf.mxu0
  %v1684 = vadd.f32 %v1450, %v1683
  %v1685 = vpop.f32.mrf.mxu0
  %1686 = vmatprep.mubr.f32.mxu0 0.0
  %1687 = vmatmul.mubr.f32.gmra.mxu0 %v1497
  %v1688 = vpop.f32.mrf.mxu0
  %v1689 = vadd.f32 %v1450, %v1688
  %v1690 = vpop.f32.mrf.mxu0
  %1691 = vmatprep.mubr.f32.mxu0 0.0
  %1692 = vmatmul.mubr.f32.gmra.mxu0 %v1500
  %v1693 = vpop.f32.mrf.mxu0
  %v1694 = vadd.f32 %v1450, %v1693
  %v1695 = vpop.f32.mrf.mxu0
  %1696 = vmatprep.mubr.f32.mxu0 0.0
  %1697 = vmatmul.mubr.f32.gmra.mxu0 %v1503
  %v1698 = vpop.f32.mrf.mxu0
  %v1699 = vadd.f32 %v1450, %v1698
  %v1700 = vpop.f32.mrf.mxu0
  %1701 = vmatprep.mubr.f32.mxu0 0.0
  %1702 = vmatmul.mubr.f32.gmra.mxu0 %v1506
  %v1703 = vpop.f32.mrf.mxu0
  %v1704 = vadd.f32 %v1450, %v1703
  %v1705 = vpop.f32.mrf.mxu0
  %1706 = vmatprep.mubr.f32.mxu0 0.0
  %1707 = vmatmul.mubr.f32.gmra.mxu0 %v1509
  %v1708 = vpop.f32.mrf.mxu0
  %v1709 = vadd.f32 %v1450, %v1708
  %v1710 = vpop.f32.mrf.mxu0
  %1711 = vmatprep.mubr.f32.mxu0 0.0
  %1712 = vmatmul.mubr.f32.gmra.mxu0 %v1512
  %v1713 = vpop.f32.mrf.mxu0
  %v1714 = vadd.f32 %v1450, %v1713
  %v1715 = vpop.f32.mrf.mxu0
  %1716 = vmatprep.mubr.f32.mxu0 0.0
  %1717 = vmatmul.mubr.f32.gmra.mxu0 %v1515
  %v1718 = vpop.f32.mrf.mxu0
  %v1719 = vadd.f32 %v1450, %v1718
  %v1720 = vpop.f32.mrf.mxu0
  %1721 = vmatprep.mubr.f32.mxu0 0.0
  %1722 = vmatmul.mubr.f32.gmra.mxu0 %v1518
  %v1723 = vpop.f32.mrf.mxu0
  %v1724 = vadd.f32 %v1450, %v1723
  %v1725 = vpop.f32.mrf.mxu0
  %1726 = vmatprep.mubr.f32.mxu0 0.0
  %1727 = vmatmul.mubr.f32.gmra.mxu0 %v1521
  %v1728 = vpop.f32.mrf.mxu0
  %v1729 = vadd.f32 %v1450, %v1728
  %v1730 = vpop.f32.mrf.mxu0
  %1731 = vmatprep.mubr.f32.mxu0 0.0
  %1732 = vmatmul.mubr.f32.gmra.mxu0 %v1524
  %v1733 = vpop.f32.mrf.mxu0
  %v1734 = vadd.f32 %v1450, %v1733
  %v1735 = vpop.f32.mrf.mxu0
  %1736 = vmatprep.mubr.f32.mxu0 0.0
  %1737 = vmatmul.mubr.f32.gmra.mxu0 %v1527
  %v1738 = vpop.f32.mrf.mxu0
  %v1739 = vadd.f32 %v1450, %v1738
  %v1740 = vpop.f32.mrf.mxu0
  %1741 = vmatprep.mubr.f32.mxu0 0.0
  %1742 = vmatmul.mubr.f32.gmra.mxu0 %v1530
  %v1743 = vpop.f32.mrf.mxu0
  %v1744 = vadd.f32 %v1450, %v1743
  %v1745 = vpop.f32.mrf.mxu0
  %1746 = vmatprep.mubr.f32.mxu0 0.0
  %1747 = vmatmul.mubr.f32.gmra.mxu0 %v1533
  %v1748 = vpop.f32.mrf.mxu0
  %v1749 = vadd.f32 %v1450, %v1748
  %v1750 = vpop.f32.mrf.mxu0
  %1751 = vmatprep.mubr.f32.mxu0 0.0
  %1752 = vmatmul.mubr.f32.gmra.mxu0 %v1536
  %v1753 = vpop.f32.mrf.mxu0
  %v1754 = vadd.f32 %v1450, %v1753
  %v1755 = vpop.f32.mrf.mxu0
  %1756 = vmatprep.mubr.f32.mxu0 0.0
  %1757 = vmatmul.mubr.f32.gmra.mxu0 %v1539
  %v1758 = vpop.f32.mrf.mxu0
  %v1759 = vadd.f32 %v1450, %v1758
  %v1760 = vpop.f32.mrf.mxu0
  %1761 = vmatprep.mubr.f32.mxu0 0.0
  %1762 = vmatmul.mubr.f32.gmra.mxu0 %v1542
  %v1763 = vpop.f32.mrf.mxu0
  %v1764 = vadd.f32 %v1450, %v1763
  %v1765 = vpop.f32.mrf.mxu0
  %1766 = vmatprep.mubr.f32.mxu0 0.0
  %1767 = vmatmul.mubr.f32.gmra.mxu0 %v1545
  %v1768 = vpop.f32.mrf.mxu0
  %v1769 = vadd.f32 %v1450, %v1768
  %v1770 = vpop.f32.mrf.mxu0
  %1771 = vdwg.mxu0
  %v1772 = vmax.f32 %v1614, 0.0
  %v1773 = vmax.f32 %v1619, 0.0
  %v1774 = vmax.f32 %v1624, 0.0
  %v1775 = vmax.f32 %v1629, 0.0
  %v1776 = vmax.f32 %v1634, 0.0
  %v1777 = vmax.f32 %v1639, 0.0
  %v1778 = vmax.f32 %v1644, 0.0
  %v1779 = vmax.f32 %v1649, 0.0
  %v1780 = vmax.f32 %v1654, 0.0
  %v1781 = vmax.f32 %v1659, 0.0
  %v1782 = vmax.f32 %v1664, 0.0
  %v1783 = vmax.f32 %v1669, 0.0
  %v1784 = vmax.f32 %v1674, 0.0
  %v1785 = vmax.f32 %v1679, 0.0
  %v1786 = vmax.f32 %v1684, 0.0
  %v1787 = vmax.f32 %v1689, 0.0
  %v1788 = vmax.f32 %v1694, 0.0
  %v1789 = vmax.f32 %v1699, 0.0
  %v1790 = vmax.f32 %v1704, 0.0
  %v1791 = vmax.f32 %v1709, 0.0
  %v1792 = vmax.f32 %v1714, 0.0
  %v1793 = vmax.f32 %v1719, 0.0
  %v1794 = vmax.f32 %v1724, 0.0
  %v1795 = vmax.f32 %v1729, 0.0
  %v1796 = vmax.f32 %v1734, 0.0
  %v1797 = vmax.f32 %v1739, 0.0
  %v1798 = vmax.f32 %v1744, 0.0
  %v1799 = vmax.f32 %v1749, 0.0
  %v1800 = vmax.f32 %v1754, 0.0
  %v1801 = vmax.f32 %v1759, 0.0
  %v1802 = vmax.f32 %v1764, 0.0
  %v1803 = vmax.f32 %v1769, 0.0
  %v1804 = vld [vmem:[%s4 + $0x20] sm:$0xff]
  %v1805 = vld [vmem:[%s4 + $0x28] sm:$0xff]
  %v1806 = vld [vmem:[%s4 + $0x30] sm:$0xff]
  %v1807 = vld [vmem:[%s4 + $0x38] sm:$0xff]
  %v1808 = vlaneseq
  %v1809 = vshrl.u32 %v1808, 7
  %v1810 = vsub.s32 2, %v1809
  %v1811 = vrot.slane %v26, %v1810
  %v1813 = vsel %vm754, %v1772, 0
  %v1816 = vsel %vm754, %v1773, 0
  %v1819 = vsel %vm754, %v1774, 0
  %v1822 = vsel %vm754, %v1775, 0
  %v1825 = vsel %vm754, %v1776, 0
  %v1828 = vsel %vm754, %v1777, 0
  %v1831 = vsel %vm754, %v1778, 0
  %v1834 = vsel %vm754, %v1779, 0
  %v1837 = vsel %vm754, %v1780, 0
  %v1840 = vsel %vm754, %v1781, 0
  %v1843 = vsel %vm754, %v1782, 0
  %v1846 = vsel %vm754, %v1783, 0
  %v1849 = vsel %vm754, %v1784, 0
  %v1852 = vsel %vm754, %v1785, 0
  %v1855 = vsel %vm754, %v1786, 0
  %v1858 = vsel %vm754, %v1787, 0
  %v1861 = vsel %vm754, %v1788, 0
  %v1864 = vsel %vm754, %v1789, 0
  %v1867 = vsel %vm754, %v1790, 0
  %v1870 = vsel %vm754, %v1791, 0
  %v1873 = vsel %vm754, %v1792, 0
  %v1876 = vsel %vm754, %v1793, 0
  %v1879 = vsel %vm754, %v1794, 0
  %v1882 = vsel %vm754, %v1795, 0
  %v1885 = vsel %vm754, %v1796, 0
  %v1888 = vsel %vm754, %v1797, 0
  %v1891 = vsel %vm754, %v1798, 0
  %v1894 = vsel %vm754, %v1799, 0
  %v1897 = vsel %vm754, %v1800, 0
  %v1900 = vsel %vm754, %v1801, 0
  %v1903 = vsel %vm754, %v1802, 0
  %v1906 = vsel %vm754, %v1803, 0
  %1908 = vmatprep.subr.mxu0 0.0
  %1909 = vmatpush1.msra.mxu0 0.0
  %1910 = vmatprep.subr.mxu0 0.0
  %1911 = vmatpush1.msra.mxu0 0.0
  %1912 = vmatprep.subr.mxu0 0.0
  %1913 = vmatpush1.msra.mxu0 0.0
  %1914 = vmatprep.subr.mxu0 0.0
  %1915 = vmatpush1.msra.mxu0 0.0
  %1916 = vmatprep.subr.mxu0 0.0
  %1917 = vmatpush1.msra.mxu0 0.0
  %1918 = vmatprep.subr.mxu0 0.0
  %1919 = vmatpush1.msra.mxu0 0.0
  %1920 = vmatprep.subr.mxu0 0.0
  %1921 = vmatpush1.msra.mxu0 0.0
  %1922 = vmatprep.subr.mxu0 0.0
  %1923 = vmatpush1.msra.mxu0 0.0
  %1924 = vmatprep.subr.mxu0 0.0
  %1925 = vmatpush1.msra.mxu0 0.0
  %1926 = vmatprep.subr.mxu0 0.0
  %1927 = vmatpush1.msra.mxu0 0.0
  %1928 = vmatprep.subr.mxu0 0.0
  %1929 = vmatpush1.msra.mxu0 0.0
  %1930 = vmatprep.subr.mxu0 0.0
  %1931 = vmatpush1.msra.mxu0 0.0
  %1932 = vmatprep.subr.mxu0 0.0
  %1933 = vmatpush1.msra.mxu0 %v1807
  %1934 = vmatprep.subr.mxu0 0.0
  %1935 = vmatpush1.msra.mxu0 %v1806
  %1936 = vmatprep.subr.mxu0 0.0
  %1937 = vmatpush1.msra.mxu0 %v1805
  %1938 = vmatprep.subr.mxu0 0.0
  %1939 = vmatpush1.msra.mxu0 %v1804
  %1940 = vmatprep.subr.mxu0 0.0
  %1941 = vmatpush2.msra.mxu0 0.0
  %1942 = vmatprep.subr.mxu0 0.0
  %1943 = vmatpush2.msra.mxu0 0.0
  %1944 = vmatprep.subr.mxu0 0.0
  %1945 = vmatpush2.msra.mxu0 0.0
  %1946 = vmatprep.subr.mxu0 0.0
  %1947 = vmatpush2.msra.mxu0 0.0
  %1948 = vmatprep.subr.mxu0 0.0
  %1949 = vmatpush2.msra.mxu0 0.0
  %1950 = vmatprep.subr.mxu0 0.0
  %1951 = vmatpush2.msra.mxu0 0.0
  %1952 = vmatprep.subr.mxu0 0.0
  %1953 = vmatpush2.msra.mxu0 0.0
  %1954 = vmatprep.subr.mxu0 0.0
  %1955 = vmatpush2.msra.mxu0 0.0
  %1956 = vmatprep.subr.mxu0 0.0
  %1957 = vmatpush2.msra.mxu0 0.0
  %1958 = vmatprep.subr.mxu0 0.0
  %1959 = vmatpush2.msra.mxu0 0.0
  %1960 = vmatprep.subr.mxu0 0.0
  %1961 = vmatpush2.msra.mxu0 0.0
  %1962 = vmatprep.subr.mxu0 0.0
  %1963 = vmatpush2.msra.mxu0 0.0
  %1964 = vmatprep.subr.mxu0 0.0
  %1965 = vmatpush2.msra.mxu0 0.0
  %1966 = vmatprep.subr.mxu0 0.0
  %1967 = vmatpush2.msra.mxu0 0.0
  %1968 = vmatprep.subr.mxu0 0.0
  %1969 = vmatpush2.msra.mxu0 0.0
  %1970 = vmatprep.subr.mxu0 0.0
  %1971 = vmatpush2.msra.mxu0 0.0
  %1972 = vmatprep.mubr.f32.mxu0 0.0
  %1973 = vmatmul.mubr.f32.gmra.mxu0 %v1813
  %v1974 = vpop.f32.mrf.mxu0
  %v1975 = vadd.f32 %v1811, %v1974
  %v1976 = vpop.f32.mrf.mxu0
  %1977 = vmatprep.mubr.f32.mxu0 0.0
  %1978 = vmatmul.mubr.f32.gmra.mxu0 %v1816
  %v1979 = vpop.f32.mrf.mxu0
  %v1980 = vadd.f32 %v1811, %v1979
  %v1981 = vpop.f32.mrf.mxu0
  %1982 = vmatprep.mubr.f32.mxu0 0.0
  %1983 = vmatmul.mubr.f32.gmra.mxu0 %v1819
  %v1984 = vpop.f32.mrf.mxu0
  %v1985 = vadd.f32 %v1811, %v1984
  %v1986 = vpop.f32.mrf.mxu0
  %1987 = vmatprep.mubr.f32.mxu0 0.0
  %1988 = vmatmul.mubr.f32.gmra.mxu0 %v1822
  %v1989 = vpop.f32.mrf.mxu0
  %v1990 = vadd.f32 %v1811, %v1989
  %v1991 = vpop.f32.mrf.mxu0
  %1992 = vmatprep.mubr.f32.mxu0 0.0
  %1993 = vmatmul.mubr.f32.gmra.mxu0 %v1825
  %v1994 = vpop.f32.mrf.mxu0
  %v1995 = vadd.f32 %v1811, %v1994
  %v1996 = vpop.f32.mrf.mxu0
  %1997 = vmatprep.mubr.f32.mxu0 0.0
  %1998 = vmatmul.mubr.f32.gmra.mxu0 %v1828
  %v1999 = vpop.f32.mrf.mxu0
  %v2000 = vadd.f32 %v1811, %v1999
  %v2001 = vpop.f32.mrf.mxu0
  %2002 = vmatprep.mubr.f32.mxu0 0.0
  %2003 = vmatmul.mubr.f32.gmra.mxu0 %v1831
  %v2004 = vpop.f32.mrf.mxu0
  %v2005 = vadd.f32 %v1811, %v2004
  %v2006 = vpop.f32.mrf.mxu0
  %2007 = vmatprep.mubr.f32.mxu0 0.0
  %2008 = vmatmul.mubr.f32.gmra.mxu0 %v1834
  %v2009 = vpop.f32.mrf.mxu0
  %v2010 = vadd.f32 %v1811, %v2009
  %v2011 = vpop.f32.mrf.mxu0
  %2012 = vmatprep.mubr.f32.mxu0 0.0
  %2013 = vmatmul.mubr.f32.gmra.mxu0 %v1837
  %v2014 = vpop.f32.mrf.mxu0
  %v2015 = vadd.f32 %v1811, %v2014
  %v2016 = vpop.f32.mrf.mxu0
  %2017 = vmatprep.mubr.f32.mxu0 0.0
  %2018 = vmatmul.mubr.f32.gmra.mxu0 %v1840
  %v2019 = vpop.f32.mrf.mxu0
  %v2020 = vadd.f32 %v1811, %v2019
  %v2021 = vpop.f32.mrf.mxu0
  %2022 = vmatprep.mubr.f32.mxu0 0.0
  %2023 = vmatmul.mubr.f32.gmra.mxu0 %v1843
  %v2024 = vpop.f32.mrf.mxu0
  %v2025 = vadd.f32 %v1811, %v2024
  %v2026 = vpop.f32.mrf.mxu0
  %2027 = vmatprep.mubr.f32.mxu0 0.0
  %2028 = vmatmul.mubr.f32.gmra.mxu0 %v1846
  %v2029 = vpop.f32.mrf.mxu0
  %v2030 = vadd.f32 %v1811, %v2029
  %v2031 = vpop.f32.mrf.mxu0
  %2032 = vmatprep.mubr.f32.mxu0 0.0
  %2033 = vmatmul.mubr.f32.gmra.mxu0 %v1849
  %v2034 = vpop.f32.mrf.mxu0
  %v2035 = vadd.f32 %v1811, %v2034
  %v2036 = vpop.f32.mrf.mxu0
  %2037 = vmatprep.mubr.f32.mxu0 0.0
  %2038 = vmatmul.mubr.f32.gmra.mxu0 %v1852
  %v2039 = vpop.f32.mrf.mxu0
  %v2040 = vadd.f32 %v1811, %v2039
  %v2041 = vpop.f32.mrf.mxu0
  %2042 = vmatprep.mubr.f32.mxu0 0.0
  %2043 = vmatmul.mubr.f32.gmra.mxu0 %v1855
  %v2044 = vpop.f32.mrf.mxu0
  %v2045 = vadd.f32 %v1811, %v2044
  %v2046 = vpop.f32.mrf.mxu0
  %2047 = vmatprep.mubr.f32.mxu0 0.0
  %2048 = vmatmul.mubr.f32.gmra.mxu0 %v1858
  %v2049 = vpop.f32.mrf.mxu0
  %v2050 = vadd.f32 %v1811, %v2049
  %v2051 = vpop.f32.mrf.mxu0
  %2052 = vmatprep.mubr.f32.mxu0 0.0
  %2053 = vmatmul.mubr.f32.gmra.mxu0 %v1861
  %v2054 = vpop.f32.mrf.mxu0
  %v2055 = vadd.f32 %v1811, %v2054
  %v2056 = vpop.f32.mrf.mxu0
  %2057 = vmatprep.mubr.f32.mxu0 0.0
  %2058 = vmatmul.mubr.f32.gmra.mxu0 %v1864
  %v2059 = vpop.f32.mrf.mxu0
  %v2060 = vadd.f32 %v1811, %v2059
  %v2061 = vpop.f32.mrf.mxu0
  %2062 = vmatprep.mubr.f32.mxu0 0.0
  %2063 = vmatmul.mubr.f32.gmra.mxu0 %v1867
  %v2064 = vpop.f32.mrf.mxu0
  %v2065 = vadd.f32 %v1811, %v2064
  %v2066 = vpop.f32.mrf.mxu0
  %2067 = vmatprep.mubr.f32.mxu0 0.0
  %2068 = vmatmul.mubr.f32.gmra.mxu0 %v1870
  %v2069 = vpop.f32.mrf.mxu0
  %v2070 = vadd.f32 %v1811, %v2069
  %v2071 = vpop.f32.mrf.mxu0
  %2072 = vmatprep.mubr.f32.mxu0 0.0
  %2073 = vmatmul.mubr.f32.gmra.mxu0 %v1873
  %v2074 = vpop.f32.mrf.mxu0
  %v2075 = vadd.f32 %v1811, %v2074
  %v2076 = vpop.f32.mrf.mxu0
  %2077 = vmatprep.mubr.f32.mxu0 0.0
  %2078 = vmatmul.mubr.f32.gmra.mxu0 %v1876
  %v2079 = vpop.f32.mrf.mxu0
  %v2080 = vadd.f32 %v1811, %v2079
  %v2081 = vpop.f32.mrf.mxu0
  %2082 = vmatprep.mubr.f32.mxu0 0.0
  %2083 = vmatmul.mubr.f32.gmra.mxu0 %v1879
  %v2084 = vpop.f32.mrf.mxu0
  %v2085 = vadd.f32 %v1811, %v2084
  %v2086 = vpop.f32.mrf.mxu0
  %2087 = vmatprep.mubr.f32.mxu0 0.0
  %2088 = vmatmul.mubr.f32.gmra.mxu0 %v1882
  %v2089 = vpop.f32.mrf.mxu0
  %v2090 = vadd.f32 %v1811, %v2089
  %v2091 = vpop.f32.mrf.mxu0
  %2092 = vmatprep.mubr.f32.mxu0 0.0
  %2093 = vmatmul.mubr.f32.gmra.mxu0 %v1885
  %v2094 = vpop.f32.mrf.mxu0
  %v2095 = vadd.f32 %v1811, %v2094
  %v2096 = vpop.f32.mrf.mxu0
  %2097 = vmatprep.mubr.f32.mxu0 0.0
  %2098 = vmatmul.mubr.f32.gmra.mxu0 %v1888
  %v2099 = vpop.f32.mrf.mxu0
  %v2100 = vadd.f32 %v1811, %v2099
  %v2101 = vpop.f32.mrf.mxu0
  %2102 = vmatprep.mubr.f32.mxu0 0.0
  %2103 = vmatmul.mubr.f32.gmra.mxu0 %v1891
  %v2104 = vpop.f32.mrf.mxu0
  %v2105 = vadd.f32 %v1811, %v2104
  %v2106 = vpop.f32.mrf.mxu0
  %2107 = vmatprep.mubr.f32.mxu0 0.0
  %2108 = vmatmul.mubr.f32.gmra.mxu0 %v1894
  %v2109 = vpop.f32.mrf.mxu0
  %v2110 = vadd.f32 %v1811, %v2109
  %v2111 = vpop.f32.mrf.mxu0
  %2112 = vmatprep.mubr.f32.mxu0 0.0
  %2113 = vmatmul.mubr.f32.gmra.mxu0 %v1897
  %v2114 = vpop.f32.mrf.mxu0
  %v2115 = vadd.f32 %v1811, %v2114
  %v2116 = vpop.f32.mrf.mxu0
  %2117 = vmatprep.mubr.f32.mxu0 0.0
  %2118 = vmatmul.mubr.f32.gmra.mxu0 %v1900
  %v2119 = vpop.f32.mrf.mxu0
  %v2120 = vadd.f32 %v1811, %v2119
  %v2121 = vpop.f32.mrf.mxu0
  %2122 = vmatprep.mubr.f32.mxu0 0.0
  %2123 = vmatmul.mubr.f32.gmra.mxu0 %v1903
  %v2124 = vpop.f32.mrf.mxu0
  %v2125 = vadd.f32 %v1811, %v2124
  %v2126 = vpop.f32.mrf.mxu0
  %2127 = vmatprep.mubr.f32.mxu0 0.0
  %2128 = vmatmul.mubr.f32.gmra.mxu0 %v1906
  %v2129 = vpop.f32.mrf.mxu0
  %v2130 = vadd.f32 %v1811, %v2129
  %v2131 = vpop.f32.mrf.mxu0
  %2132 = vdwg.mxu0
  %v2133 = vmax.f32 %v1975, 0.0
  %v2134 = vmax.f32 %v1980, 0.0
  %v2135 = vmax.f32 %v1985, 0.0
  %v2136 = vmax.f32 %v1990, 0.0
  %v2137 = vmax.f32 %v1995, 0.0
  %v2138 = vmax.f32 %v2000, 0.0
  %v2139 = vmax.f32 %v2005, 0.0
  %v2140 = vmax.f32 %v2010, 0.0
  %v2141 = vmax.f32 %v2015, 0.0
  %v2142 = vmax.f32 %v2020, 0.0
  %v2143 = vmax.f32 %v2025, 0.0
  %v2144 = vmax.f32 %v2030, 0.0
  %v2145 = vmax.f32 %v2035, 0.0
  %v2146 = vmax.f32 %v2040, 0.0
  %v2147 = vmax.f32 %v2045, 0.0
  %v2148 = vmax.f32 %v2050, 0.0
  %v2149 = vmax.f32 %v2055, 0.0
  %v2150 = vmax.f32 %v2060, 0.0
  %v2151 = vmax.f32 %v2065, 0.0
  %v2152 = vmax.f32 %v2070, 0.0
  %v2153 = vmax.f32 %v2075, 0.0
  %v2154 = vmax.f32 %v2080, 0.0
  %v2155 = vmax.f32 %v2085, 0.0
  %v2156 = vmax.f32 %v2090, 0.0
  %v2157 = vmax.f32 %v2095, 0.0
  %v2158 = vmax.f32 %v2100, 0.0
  %v2159 = vmax.f32 %v2105, 0.0
  %v2160 = vmax.f32 %v2110, 0.0
  %v2161 = vmax.f32 %v2115, 0.0
  %v2162 = vmax.f32 %v2120, 0.0
  %v2163 = vmax.f32 %v2125, 0.0
  %v2164 = vmax.f32 %v2130, 0.0
  %v2165 = vmax.f32 %v2133, %v2137
  %v2166 = vmax.f32 %v2134, %v2138
  %v2167 = vmax.f32 %v2135, %v2139
  %v2168 = vmax.f32 %v2136, %v2140
  %v2169 = vmax.f32 %v2165, %v2141
  %v2170 = vmax.f32 %v2166, %v2142
  %v2171 = vmax.f32 %v2167, %v2143
  %v2172 = vmax.f32 %v2168, %v2144
  %v2173 = vmax.f32 %v2169, %v2145
  %v2174 = vmax.f32 %v2170, %v2146
  %v2175 = vmax.f32 %v2171, %v2147
  %v2176 = vmax.f32 %v2172, %v2148
  %v2177 = vmax.f32 %v2173, %v2149
  %v2178 = vmax.f32 %v2174, %v2150
  %v2179 = vmax.f32 %v2175, %v2151
  %v2180 = vmax.f32 %v2176, %v2152
  %v2181 = vmax.f32 %v2177, %v2153
  %v2182 = vmax.f32 %v2178, %v2154
  %v2183 = vmax.f32 %v2179, %v2155
  %v2184 = vmax.f32 %v2180, %v2156
  %v2185 = vmax.f32 %v2181, %v2157
  %v2186 = vmax.f32 %v2182, %v2158
  %v2187 = vmax.f32 %v2183, %v2159
  %v2188 = vmax.f32 %v2184, %v2160
  %v2189 = vmax.f32 %v2185, %v2161
  %v2190 = vmax.f32 %v2186, %v2162
  %v2191 = vmax.f32 %v2187, %v2163
  %v2192 = vmax.f32 %v2188, %v2164
  %v2193 = vld [vmem:[%s4 + $0x40] sm:$0xff]
  %v2194 = vld [vmem:[%s4 + $0x48] sm:$0xff]
  %v2195 = vld [vmem:[%s4 + $0x50] sm:$0xff]
  %v2196 = vld [vmem:[%s4 + $0x58] sm:$0xff]
  %v2197 = vlaneseq
  %v2198 = vshrl.u32 %v2197, 7
  %v2199 = vsub.s32 3, %v2198
  %v2200 = vrot.slane %v26, %v2199
  %v2202 = vsel %vm754, %v2189, 0
  %v2205 = vsel %vm754, %v2190, 0
  %v2208 = vsel %vm754, %v2191, 0
  %v2211 = vsel %vm754, %v2192, 0
  %2213 = vmatprep.subr.mxu0 0.0
  %2214 = vmatpush1.msra.mxu0 0.0
  %2215 = vmatprep.subr.mxu0 0.0
  %2216 = vmatpush1.msra.mxu0 0.0
  %2217 = vmatprep.subr.mxu0 0.0
  %2218 = vmatpush1.msra.mxu0 0.0
  %2219 = vmatprep.subr.mxu0 0.0
  %2220 = vmatpush1.msra.mxu0 0.0
  %2221 = vmatprep.subr.mxu0 0.0
  %2222 = vmatpush1.msra.mxu0 0.0
  %2223 = vmatprep.subr.mxu0 0.0
  %2224 = vmatpush1.msra.mxu0 0.0
  %2225 = vmatprep.subr.mxu0 0.0
  %2226 = vmatpush1.msra.mxu0 0.0
  %2227 = vmatprep.subr.mxu0 0.0
  %2228 = vmatpush1.msra.mxu0 0.0
  %2229 = vmatprep.subr.mxu0 0.0
  %2230 = vmatpush1.msra.mxu0 0.0
  %2231 = vmatprep.subr.mxu0 0.0
  %2232 = vmatpush1.msra.mxu0 0.0
  %2233 = vmatprep.subr.mxu0 0.0
  %2234 = vmatpush1.msra.mxu0 0.0
  %2235 = vmatprep.subr.mxu0 0.0
  %2236 = vmatpush1.msra.mxu0 0.0
  %2237 = vmatprep.subr.mxu0 0.0
  %2238 = vmatpush1.msra.mxu0 %v2196
  %2239 = vmatprep.subr.mxu0 0.0
  %2240 = vmatpush1.msra.mxu0 %v2195
  %2241 = vmatprep.subr.mxu0 0.0
  %2242 = vmatpush1.msra.mxu0 %v2194
  %2243 = vmatprep.subr.mxu0 0.0
  %2244 = vmatpush1.msra.mxu0 %v2193
  %2245 = vmatprep.subr.mxu0 0.0
  %2246 = vmatpush2.msra.mxu0 0.0
  %2247 = vmatprep.subr.mxu0 0.0
  %2248 = vmatpush2.msra.mxu0 0.0
  %2249 = vmatprep.subr.mxu0 0.0
  %2250 = vmatpush2.msra.mxu0 0.0
  %2251 = vmatprep.subr.mxu0 0.0
  %2252 = vmatpush2.msra.mxu0 0.0
  %2253 = vmatprep.subr.mxu0 0.0
  %2254 = vmatpush2.msra.mxu0 0.0
  %2255 = vmatprep.subr.mxu0 0.0
  %2256 = vmatpush2.msra.mxu0 0.0
  %2257 = vmatprep.subr.mxu0 0.0
  %2258 = vmatpush2.msra.mxu0 0.0
  %2259 = vmatprep.subr.mxu0 0.0
  %2260 = vmatpush2.msra.mxu0 0.0
  %2261 = vmatprep.subr.mxu0 0.0
  %2262 = vmatpush2.msra.mxu0 0.0
  %2263 = vmatprep.subr.mxu0 0.0
  %2264 = vmatpush2.msra.mxu0 0.0
  %2265 = vmatprep.subr.mxu0 0.0
  %2266 = vmatpush2.msra.mxu0 0.0
  %2267 = vmatprep.subr.mxu0 0.0
  %2268 = vmatpush2.msra.mxu0 0.0
  %2269 = vmatprep.subr.mxu0 0.0
  %2270 = vmatpush2.msra.mxu0 0.0
  %2271 = vmatprep.subr.mxu0 0.0
  %2272 = vmatpush2.msra.mxu0 0.0
  %2273 = vmatprep.subr.mxu0 0.0
  %2274 = vmatpush2.msra.mxu0 0.0
  %2275 = vmatprep.subr.mxu0 0.0
  %2276 = vmatpush2.msra.mxu0 0.0
  %2277 = vmatprep.mubr.f32.mxu0 0.0
  %2278 = vmatmul.mubr.f32.gmra.mxu0 %v2202
  %v2279 = vpop.f32.mrf.mxu0
  %v2280 = vadd.f32 %v2200, %v2279
  %v2281 = vpop.f32.mrf.mxu0
  %2282 = vmatprep.mubr.f32.mxu0 0.0
  %2283 = vmatmul.mubr.f32.gmra.mxu0 %v2205
  %v2284 = vpop.f32.mrf.mxu0
  %v2285 = vadd.f32 %v2200, %v2284
  %v2286 = vpop.f32.mrf.mxu0
  %2287 = vmatprep.mubr.f32.mxu0 0.0
  %2288 = vmatmul.mubr.f32.gmra.mxu0 %v2208
  %v2289 = vpop.f32.mrf.mxu0
  %v2290 = vadd.f32 %v2200, %v2289
  %v2291 = vpop.f32.mrf.mxu0
  %2292 = vmatprep.mubr.f32.mxu0 0.0
  %2293 = vmatmul.mubr.f32.gmra.mxu0 %v2211
  %v2294 = vpop.f32.mrf.mxu0
  %v2295 = vadd.f32 %v2200, %v2294
  %v2296 = vpop.f32.mrf.mxu0
  %2297 = vdwg.mxu0
  %v2298 = vmax.f32 %v2280, 0.0
  %v2299 = vmax.f32 %v2285, 0.0
  %v2300 = vmax.f32 %v2290, 0.0
  %v2301 = vmax.f32 %v2295, 0.0
  %v2302 = vld [vmem:[%s4 + $0x60] sm:$0xff]
  %v2303 = vld [vmem:[%s4 + $0x68] sm:$0xff]
  %v2304 = vld [vmem:[%s4 + $0x70] sm:$0xff]
  %v2305 = vld [vmem:[%s4 + $0x78] sm:$0xff]
  %v2306 = vlaneseq
  %v2307 = vshrl.u32 %v2306, 7
  %v2308 = vsub.s32 4, %v2307
  %v2309 = vrot.slane %v26, %v2308
  %v2311 = vsel %vm754, %v2298, 0
  %v2314 = vsel %vm754, %v2299, 0
  %v2317 = vsel %vm754, %v2300, 0
  %v2320 = vsel %vm754, %v2301, 0
  %2322 = vmatprep.subr.mxu0 0.0
  %2323 = vmatpush1.msra.mxu0 0.0
  %2324 = vmatprep.subr.mxu0 0.0
  %2325 = vmatpush1.msra.mxu0 0.0
  %2326 = vmatprep.subr.mxu0 0.0
  %2327 = vmatpush1.msra.mxu0 0.0
  %2328 = vmatprep.subr.mxu0 0.0
  %2329 = vmatpush1.msra.mxu0 0.0
  %2330 = vmatprep.subr.mxu0 0.0
  %2331 = vmatpush1.msra.mxu0 0.0
  %2332 = vmatprep.subr.mxu0 0.0
  %2333 = vmatpush1.msra.mxu0 0.0
  %2334 = vmatprep.subr.mxu0 0.0
  %2335 = vmatpush1.msra.mxu0 0.0
  %2336 = vmatprep.subr.mxu0 0.0
  %2337 = vmatpush1.msra.mxu0 0.0
  %2338 = vmatprep.subr.mxu0 0.0
  %2339 = vmatpush1.msra.mxu0 0.0
  %2340 = vmatprep.subr.mxu0 0.0
  %2341 = vmatpush1.msra.mxu0 0.0
  %2342 = vmatprep.subr.mxu0 0.0
  %2343 = vmatpush1.msra.mxu0 0.0
  %2344 = vmatprep.subr.mxu0 0.0
  %2345 = vmatpush1.msra.mxu0 0.0
  %2346 = vmatprep.subr.mxu0 0.0
  %2347 = vmatpush1.msra.mxu0 %v2305
  %2348 = vmatprep.subr.mxu0 0.0
  %2349 = vmatpush1.msra.mxu0 %v2304
  %2350 = vmatprep.subr.mxu0 0.0
  %2351 = vmatpush1.msra.mxu0 %v2303
  %2352 = vmatprep.subr.mxu0 0.0
  %2353 = vmatpush1.msra.mxu0 %v2302
  %2354 = vmatprep.subr.mxu0 0.0
  %2355 = vmatpush2.msra.mxu0 0.0
  %2356 = vmatprep.subr.mxu0 0.0
  %2357 = vmatpush2.msra.mxu0 0.0
  %2358 = vmatprep.subr.mxu0 0.0
  %2359 = vmatpush2.msra.mxu0 0.0
  %2360 = vmatprep.subr.mxu0 0.0
  %2361 = vmatpush2.msra.mxu0 0.0
  %2362 = vmatprep.subr.mxu0 0.0
  %2363 = vmatpush2.msra.mxu0 0.0
  %2364 = vmatprep.subr.mxu0 0.0
  %2365 = vmatpush2.msra.mxu0 0.0
  %2366 = vmatprep.subr.mxu0 0.0
  %2367 = vmatpush2.msra.mxu0 0.0
  %2368 = vmatprep.subr.mxu0 0.0
  %2369 = vmatpush2.msra.mxu0 0.0
  %2370 = vmatprep.subr.mxu0 0.0
  %2371 = vmatpush2.msra.mxu0 0.0
  %2372 = vmatprep.subr.mxu0 0.0
  %2373 = vmatpush2.msra.mxu0 0.0
  %2374 = vmatprep.subr.mxu0 0.0
  %2375 = vmatpush2.msra.mxu0 0.0
  %2376 = vmatprep.subr.mxu0 0.0
  %2377 = vmatpush2.msra.mxu0 0.0
  %2378 = vmatprep.subr.mxu0 0.0
  %2379 = vmatpush2.msra.mxu0 0.0
  %2380 = vmatprep.subr.mxu0 0.0
  %2381 = vmatpush2.msra.mxu0 0.0
  %2382 = vmatprep.subr.mxu0 0.0
  %2383 = vmatpush2.msra.mxu0 0.0
  %2384 = vmatprep.subr.mxu0 0.0
  %2385 = vmatpush2.msra.mxu0 0.0
  %2386 = vmatprep.mubr.f32.mxu0 0.0
  %2387 = vmatmul.mubr.f32.gmra.mxu0 %v2311
  %v2388 = vpop.f32.mrf.mxu0
  %v2389 = vadd.f32 %v2309, %v2388
  %v2390 = vpop.f32.mrf.mxu0
  %2391 = vmatprep.mubr.f32.mxu0 0.0
  %2392 = vmatmul.mubr.f32.gmra.mxu0 %v2314
  %v2393 = vpop.f32.mrf.mxu0
  %v2394 = vadd.f32 %v2309, %v2393
  %v2395 = vpop.f32.mrf.mxu0
  %2396 = vmatprep.mubr.f32.mxu0 0.0
  %2397 = vmatmul.mubr.f32.gmra.mxu0 %v2317
  %v2398 = vpop.f32.mrf.mxu0
  %v2399 = vadd.f32 %v2309, %v2398
  %v2400 = vpop.f32.mrf.mxu0
  %2401 = vmatprep.mubr.f32.mxu0 0.0
  %2402 = vmatmul.mubr.f32.gmra.mxu0 %v2320
  %v2403 = vpop.f32.mrf.mxu0
  %v2404 = vadd.f32 %v2309, %v2403
  %v2405 = vpop.f32.mrf.mxu0
  %2406 = vdwg.mxu0
  %v2407 = vmax.f32 %v2389, 0.0
  %v2408 = vmax.f32 %v2394, 0.0
  %v2409 = vmax.f32 %v2399, 0.0
  %v2410 = vmax.f32 %v2404, 0.0
  %v2411 = vld [vmem:[%s5] sm:$0xff]
  %v2412 = vld [vmem:[%s5 + $0x8] sm:$0xff]
  %v2413 = vld [vmem:[%s5 + $0x10] sm:$0xff]
  %v2414 = vld [vmem:[%s5 + $0x18] sm:$0xff]
  %v2415 = vlaneseq
  %v2416 = vshrl.u32 %v2415, 7
  %v2417 = vsub.s32 5, %v2416
  %v2418 = vrot.slane %v26, %v2417
  %v2420 = vsel %vm754, %v2407, 0
  %v2423 = vsel %vm754, %v2408, 0
  %v2426 = vsel %vm754, %v2409, 0
  %v2429 = vsel %vm754, %v2410, 0
  %2431 = vmatprep.subr.mxu0 0.0
  %2432 = vmatpush1.msra.mxu0 0.0
  %2433 = vmatprep.subr.mxu0 0.0
  %2434 = vmatpush1.msra.mxu0 0.0
  %2435 = vmatprep.subr.mxu0 0.0
  %2436 = vmatpush1.msra.mxu0 0.0
  %2437 = vmatprep.subr.mxu0 0.0
  %2438 = vmatpush1.msra.mxu0 0.0
  %2439 = vmatprep.subr.mxu0 0.0
  %2440 = vmatpush1.msra.mxu0 0.0
  %2441 = vmatprep.subr.mxu0 0.0
  %2442 = vmatpush1.msra.mxu0 0.0
  %2443 = vmatprep.subr.mxu0 0.0
  %2444 = vmatpush1.msra.mxu0 0.0
  %2445 = vmatprep.subr.mxu0 0.0
  %2446 = vmatpush1.msra.mxu0 0.0
  %2447 = vmatprep.subr.mxu0 0.0
  %2448 = vmatpush1.msra.mxu0 0.0
  %2449 = vmatprep.subr.mxu0 0.0
  %2450 = vmatpush1.msra.mxu0 0.0
  %2451 = vmatprep.subr.mxu0 0.0
  %2452 = vmatpush1.msra.mxu0 0.0
  %2453 = vmatprep.subr.mxu0 0.0
  %2454 = vmatpush1.msra.mxu0 0.0
  %2455 = vmatprep.subr.mxu0 0.0
  %2456 = vmatpush1.msra.mxu0 %v2414
  %2457 = vmatprep.subr.mxu0 0.0
  %2458 = vmatpush1.msra.mxu0 %v2413
  %2459 = vmatprep.subr.mxu0 0.0
  %2460 = vmatpush1.msra.mxu0 %v2412
  %2461 = vmatprep.subr.mxu0 0.0
  %2462 = vmatpush1.msra.mxu0 %v2411
  %2463 = vmatprep.subr.mxu0 0.0
  %2464 = vmatpush2.msra.mxu0 0.0
  %2465 = vmatprep.subr.mxu0 0.0
  %2466 = vmatpush2.msra.mxu0 0.0
  %2467 = vmatprep.subr.mxu0 0.0
  %2468 = vmatpush2.msra.mxu0 0.0
  %2469 = vmatprep.subr.mxu0 0.0
  %2470 = vmatpush2.msra.mxu0 0.0
  %2471 = vmatprep.subr.mxu0 0.0
  %2472 = vmatpush2.msra.mxu0 0.0
  %2473 = vmatprep.subr.mxu0 0.0
  %2474 = vmatpush2.msra.mxu0 0.0
  %2475 = vmatprep.subr.mxu0 0.0
  %2476 = vmatpush2.msra.mxu0 0.0
  %2477 = vmatprep.subr.mxu0 0.0
  %2478 = vmatpush2.msra.mxu0 0.0
  %2479 = vmatprep.subr.mxu0 0.0
  %2480 = vmatpush2.msra.mxu0 0.0
  %2481 = vmatprep.subr.mxu0 0.0
  %2482 = vmatpush2.msra.mxu0 0.0
  %2483 = vmatprep.subr.mxu0 0.0
  %2484 = vmatpush2.msra.mxu0 0.0
  %2485 = vmatprep.subr.mxu0 0.0
  %2486 = vmatpush2.msra.mxu0 0.0
  %2487 = vmatprep.subr.mxu0 0.0
  %2488 = vmatpush2.msra.mxu0 0.0
  %2489 = vmatprep.subr.mxu0 0.0
  %2490 = vmatpush2.msra.mxu0 0.0
  %2491 = vmatprep.subr.mxu0 0.0
  %2492 = vmatpush2.msra.mxu0 0.0
  %2493 = vmatprep.subr.mxu0 0.0
  %2494 = vmatpush2.msra.mxu0 0.0
  %2495 = vmatprep.mubr.f32.mxu0 0.0
  %2496 = vmatmul.mubr.f32.gmra.mxu0 %v2420
  %v2497 = vpop.f32.mrf.mxu0
  %v2498 = vadd.f32 %v2418, %v2497
  %v2499 = vpop.f32.mrf.mxu0
  %2500 = vmatprep.mubr.f32.mxu0 0.0
  %2501 = vmatmul.mubr.f32.gmra.mxu0 %v2423
  %v2502 = vpop.f32.mrf.mxu0
  %v2503 = vadd.f32 %v2418, %v2502
  %v2504 = vpop.f32.mrf.mxu0
  %2505 = vmatprep.mubr.f32.mxu0 0.0
  %2506 = vmatmul.mubr.f32.gmra.mxu0 %v2426
  %v2507 = vpop.f32.mrf.mxu0
  %v2508 = vadd.f32 %v2418, %v2507
  %v2509 = vpop.f32.mrf.mxu0
  %2510 = vmatprep.mubr.f32.mxu0 0.0
  %2511 = vmatmul.mubr.f32.gmra.mxu0 %v2429
  %v2512 = vpop.f32.mrf.mxu0
  %v2513 = vadd.f32 %v2418, %v2512
  %v2514 = vpop.f32.mrf.mxu0
  %2515 = vdwg.mxu0
  %v2516 = vld [vmem:[%s5 + $0x20] sm:$0xff]
  %v2517 = vld [vmem:[%s5 + $0x28] sm:$0xff]
  %v2518 = vld [vmem:[%s5 + $0x30] sm:$0xff]
  %v2519 = vld [vmem:[%s5 + $0x38] sm:$0xff]
  %2520 = vmatprep.subr.mxu0 0.0
  %2521 = vmatpush1.msra.mxu0 0.0
  %2522 = vmatprep.subr.mxu0 0.0
  %2523 = vmatpush1.msra.mxu0 0.0
  %2524 = vmatprep.subr.mxu0 0.0
  %2525 = vmatpush1.msra.mxu0 0.0
  %2526 = vmatprep.subr.mxu0 0.0
  %2527 = vmatpush1.msra.mxu0 0.0
  %2528 = vmatprep.subr.mxu0 0.0
  %2529 = vmatpush1.msra.mxu0 0.0
  %2530 = vmatprep.subr.mxu0 0.0
  %2531 = vmatpush1.msra.mxu0 0.0
  %2532 = vmatprep.subr.mxu0 0.0
  %2533 = vmatpush1.msra.mxu0 0.0
  %2534 = vmatprep.subr.mxu0 0.0
  %2535 = vmatpush1.msra.mxu0 0.0
  %2536 = vmatprep.subr.mxu0 0.0
  %2537 = vmatpush1.msra.mxu0 0.0
  %2538 = vmatprep.subr.mxu0 0.0
  %2539 = vmatpush1.msra.mxu0 0.0
  %2540 = vmatprep.subr.mxu0 0.0
  %2541 = vmatpush1.msra.mxu0 0.0
  %2542 = vmatprep.subr.mxu0 0.0
  %2543 = vmatpush1.msra.mxu0 0.0
  %2544 = vmatprep.subr.mxu0 0.0
  %2545 = vmatpush1.msra.mxu0 %v2519
  %2546 = vmatprep.subr.mxu0 0.0
  %2547 = vmatpush1.msra.mxu0 %v2518
  %2548 = vmatprep.subr.mxu0 0.0
  %2549 = vmatpush1.msra.mxu0 %v2517
  %2550 = vmatprep.subr.mxu0 0.0
  %2551 = vmatpush1.msra.mxu0 %v2516
  %2552 = vmatprep.subr.mxu0 0.0
  %2553 = vmatpush2.msra.mxu0 0.0
  %2554 = vmatprep.subr.mxu0 0.0
  %2555 = vmatpush2.msra.mxu0 0.0
  %2556 = vmatprep.subr.mxu0 0.0
  %2557 = vmatpush2.msra.mxu0 0.0
  %2558 = vmatprep.subr.mxu0 0.0
  %2559 = vmatpush2.msra.mxu0 0.0
  %2560 = vmatprep.subr.mxu0 0.0
  %2561 = vmatpush2.msra.mxu0 0.0
  %2562 = vmatprep.subr.mxu0 0.0
  %2563 = vmatpush2.msra.mxu0 0.0
  %2564 = vmatprep.subr.mxu0 0.0
  %2565 = vmatpush2.msra.mxu0 0.0
  %2566 = vmatprep.subr.mxu0 0.0
  %2567 = vmatpush2.msra.mxu0 0.0
  %2568 = vmatprep.subr.mxu0 0.0
  %2569 = vmatpush2.msra.mxu0 0.0
  %2570 = vmatprep.subr.mxu0 0.0
  %2571 = vmatpush2.msra.mxu0 0.0
  %2572 = vmatprep.subr.mxu0 0.0
  %2573 = vmatpush2.msra.mxu0 0.0
  %2574 = vmatprep.subr.mxu0 0.0
  %2575 = vmatpush2.msra.mxu0 0.0
  %2576 = vmatprep.subr.mxu0 0.0
  %2577 = vmatpush2.msra.mxu0 0.0
  %2578 = vmatprep.subr.mxu0 0.0
  %2579 = vmatpush2.msra.mxu0 0.0
  %2580 = vmatprep.subr.mxu0 0.0
  %2581 = vmatpush2.msra.mxu0 0.0
  %2582 = vmatprep.subr.mxu0 0.0
  %2583 = vmatpush2.msra.mxu0 0.0
  %2584 = vmatprep.mubr.f32.mxu0 0.0
  %2585 = vmatmul.mubr.f32.gmra.mxu0 %v2202
  %v2586 = vpop.f32.mrf.mxu0
  %v2587 = vadd.f32 0.0, %v2586
  %v2588 = vpop.f32.mrf.mxu0
  %2589 = vmatprep.mubr.f32.mxu0 0.0
  %2590 = vmatmul.mubr.f32.gmra.mxu0 %v2205
  %v2591 = vpop.f32.mrf.mxu0
  %v2592 = vadd.f32 0.0, %v2591
  %v2593 = vpop.f32.mrf.mxu0
  %2594 = vmatprep.mubr.f32.mxu0 0.0
  %2595 = vmatmul.mubr.f32.gmra.mxu0 %v2208
  %v2596 = vpop.f32.mrf.mxu0
  %v2597 = vadd.f32 0.0, %v2596
  %v2598 = vpop.f32.mrf.mxu0
  %2599 = vmatprep.mubr.f32.mxu0 0.0
  %2600 = vmatmul.mubr.f32.gmra.mxu0 %v2211
  %v2601 = vpop.f32.mrf.mxu0
  %v2602 = vadd.f32 0.0, %v2601
  %v2603 = vpop.f32.mrf.mxu0
  %2604 = vdwg.mxu0
  %v2605 = vadd.f32 %v2498, %v2587
  %v2606 = vadd.f32 %v2503, %v2592
  %v2607 = vadd.f32 %v2508, %v2597
  %v2608 = vadd.f32 %v2513, %v2602
  %2609 = vst [vmem:[%s7] sm:$0xff] %v2605
  %2610 = vst [vmem:[%s7 + $0x8] sm:$0xff] %v2606
  %2611 = vst [vmem:[%s7 + $0x10] sm:$0xff] %v2607
  %2612 = vst [vmem:[%s7 + $0x18] sm:$0xff] %v2608
  // Predicated region
  $region30: #{proposal_module_forward.1} parent=0 // pred_check
    _
  $region31: #{proposal_module_forward.1} parent=0 // pred_check_branch
    %2614 = sbr.rel (0) target = $region33
  $region32: #{proposal_module_forward.1} parent=0 // pred_region
    _
  $region33: #{proposal_module_forward.1} parent=0 // pred_fallthru
    _
  // Predicated region
  $region34: #{proposal_module_forward.1} parent=0 // pred_check
    _
  $region35: #{proposal_module_forward.1} parent=0 // pred_check_branch
    %2616 = sbr.rel (0) target = $region37
  $region36: #{proposal_module_forward.1} parent=0 // pred_region
    _
  $region37: #{proposal_module_forward.1} parent=0 // pred_fallthru
    _

</llo_original>
